<compile_context>
chip_gen: v6e
topology: v6e:2x2x1
jax: 0.10.0
libtpu: 0.0.40
codegen_flags: <defaults>
</compile_context>

<pallas_src>
import functools
import math

import jax
import jax.numpy as jnp
from jax.experimental import pallas as pl
from jax.experimental.pallas import tpu as pltpu

LN_EPS = 1e-12
# Explicit scoped-VMEM budget: well under v7x's 64 MiB physical, plenty for
# tm=256-512 bf16 tiles + resident (double-buffered) H<=1024 weights.
_VMEM_LIMIT = 48 * 1024 * 1024


def _round_up(x, m):
    return (x + m - 1) // m * m


# --------------------------- BertSelfAttention ---------------------------
def _self_attention_kernel(x_ref, mask_ref, wq_ref, bq_ref, wk_ref, bk_ref,
                           wv_ref, bv_ref, o_ref, *, num_heads, head_dim):
    """One batch element per grid step: QKV projections + per-head attention."""
    x = x_ref[0]                                                  # (S, H), matmul dtype
    q = jnp.dot(x, wq_ref[...], preferred_element_type=jnp.float32) + bq_ref[...]
    k = jnp.dot(x, wk_ref[...], preferred_element_type=jnp.float32) + bk_ref[...]
    v = jnp.dot(x, wv_ref[...], preferred_element_type=jnp.float32) + bv_ref[...]

    mask = mask_ref[0].astype(jnp.float32)                        # (1, S) additive mask
    scale = 1.0 / math.sqrt(head_dim)

    ctx = []
    for h in range(num_heads):                                    # static unroll over heads
        sl = slice(h * head_dim, (h + 1) * head_dim)
        qh, kh, vh = q[:, sl], k[:, sl], v[:, sl]
        s = jnp.dot(qh, kh.T, preferred_element_type=jnp.float32) * scale + mask
        s = s - jnp.max(s, axis=-1, keepdims=True)                # stable softmax
        p = jnp.exp(s)
        p = p / jnp.sum(p, axis=-1, keepdims=True)
        # attention-probs dropout: inference-mode identity
        ctx.append(jnp.dot(p, vh, preferred_element_type=jnp.float32))

    # Single lane-dense (S, H) store instead of per-head masked partial stores.
    o_ref[0] = jnp.concatenate(ctx, axis=-1).astype(o_ref.dtype)


def bert_self_attention(hidden_states, attention_mask, wq, bq, wk, bk, wv, bv,
                        *, num_heads, matmul_dtype=jnp.bfloat16):
    """hidden_states: [B, S, H]; attention_mask: additive, reshapeable to [B, S].
    Weights are torch nn.Linear layout [H_out, H_in]."""
    B, S, H = hidden_states.shape
    head_dim = H // num_heads

    x = hidden_states.astype(matmul_dtype)                        # bf16 MXU inputs
    # Standard BERT padding mask [B,1,1,S] -> [B,1,S] (broadcast over heads & queries).
    # TODO(synk): general per-query [B,1,S_q,S_k] masks not supported by this kernel.
    mask = attention_mask.reshape(B, 1, S).astype(jnp.float32)

    wq_t = wq.T.astype(matmul_dtype)                              # [H_in, H_out]
    wk_t = wk.T.astype(matmul_dtype)
    wv_t = wv.T.astype(matmul_dtype)
    bq2 = bq.reshape(1, H).astype(jnp.float32)
    bk2 = bk.reshape(1, H).astype(jnp.float32)
    bv2 = bv.reshape(1, H).astype(jnp.float32)

    kernel = functools.partial(_self_attention_kernel,
                               num_heads=num_heads, head_dim=head_dim)
    const = lambda b: (0, 0)

    return pl.pallas_call(
        kernel,
        out_shape=jax.ShapeDtypeStruct((B, S, H), jnp.float32),
        grid_spec=pltpu.PrefetchScalarGridSpec(
            num_scalar_prefetch=0,
            grid=(B,),
            in_specs=[
                pl.BlockSpec((1, S, H), lambda b: (b, 0, 0)),     # hidden_states
                pl.BlockSpec((1, 1, S), lambda b: (b, 0, 0)),     # additive mask
                pl.BlockSpec((H, H), const),                      # Wq (resident)
                pl.BlockSpec((1, H), const),                      # bq
                pl.BlockSpec((H, H), const),                      # Wk
                pl.BlockSpec((1, H), const),                      # bk
                pl.BlockSpec((H, H), const),                      # Wv
                pl.BlockSpec((1, H), const),                      # bv
            ],
            out_specs=pl.BlockSpec((1, S, H), lambda b: (b, 0, 0)),
        ),
        compiler_params=pltpu.CompilerParams(
            dimension_semantics=("parallel",),
            vmem_limit_bytes=_VMEM_LIMIT),
    )(x, mask, wq_t, bq2, wk_t, bk2, wv_t, bv2)


# --------------------------- BertSelfOutput ---------------------------
def _self_output_kernel(x_ref, w_ref, b_ref, res_ref, gamma_ref, beta_ref, o_ref):
    # Dense: x @ W^T + b (bf16 MXU inputs, f32 accumulation).
    h = jnp.dot(x_ref[...], w_ref[...], preferred_element_type=jnp.float32)
    h = h + b_ref[...]
    # hidden dropout: inference-mode identity
    h = h + res_ref[...]                                          # residual (f32)
    # TF-style LayerNorm (eps inside the sqrt); rsqrt goes to the (otherwise idle) EUP.
    u = jnp.mean(h, axis=-1, keepdims=True)
    d = h - u
    s = jnp.mean(d * d, axis=-1, keepdims=True)
    xhat = d * jax.lax.rsqrt(s + LN_EPS)
    o_ref[...] = (gamma_ref[...] * xhat + beta_ref[...]).astype(o_ref.dtype)


def bert_self_output(hidden_states, input_tensor, weight, bias, gamma, beta,
                     *, tm=256, matmul_dtype=jnp.bfloat16):
    """hidden_states/input_tensor: [B, S, H]; weight: [H_out, H_in] (torch layout)."""
    B, S, H = hidden_states.shape
    M = B * S

    x2 = hidden_states.reshape(M, H).astype(matmul_dtype)         # MXU inputs bf16
    r2 = input_tensor.reshape(M, H).astype(jnp.float32)           # eltwise math stays f32
    w_t = weight.T.astype(matmul_dtype)                           # [H_in, H_out]
    b2 = bias.reshape(1, H).astype(jnp.float32)
    g2 = gamma.reshape(1, H).astype(jnp.float32)
    be2 = beta.reshape(1, H).astype(jnp.float32)

    # Large row tile for MXU utilization; pad rows instead of asserting divisibility.
    tm_eff = min(tm, _round_up(M, 16))
    m_pad = _round_up(M, tm_eff)
    if m_pad != M:
        x2 = jnp.pad(x2, ((0, m_pad - M), (0, 0)))
        r2 = jnp.pad(r2, ((0, m_pad - M), (0, 0)))

    const = lambda i: (0, 0)
    out = pl.pallas_call(
        _self_output_kernel,
        out_shape=jax.ShapeDtypeStruct((m_pad, H), input_tensor.dtype),
        grid_spec=pltpu.PrefetchScalarGridSpec(
            num_scalar_prefetch=0,
            grid=(m_pad // tm_eff,),
            in_specs=[
                pl.BlockSpec((tm_eff, H), lambda i: (i, 0)),      # x row tile
                pl.BlockSpec((H, H), const),                      # Wo (resident)
                pl.BlockSpec((1, H), const),                      # bo
                pl.BlockSpec((tm_eff, H), lambda i: (i, 0)),      # residual row tile
                pl.BlockSpec((1, H), const),                      # LN gamma
                pl.BlockSpec((1, H), const),                      # LN beta
            ],
            out_specs=pl.BlockSpec((tm_eff, H), lambda i: (i, 0)),
        ),
        compiler_params=pltpu.CompilerParams(
            dimension_semantics=("parallel",),
            vmem_limit_bytes=_VMEM_LIMIT),
    )(x2, w_t, b2, r2, g2, be2)

    return out[:M].reshape(B, S, H)


# --------------------------- BertAttention ---------------------------
def bert_attention(input_tensor, attention_mask, params, *, num_heads,
                   tm=256, matmul_dtype=jnp.bfloat16):
    self_out = bert_self_attention(
        input_tensor, attention_mask,
        params["wq"], params["bq"], params["wk"], params["bk"],
        params["wv"], params["bv"],
        num_heads=num_heads, matmul_dtype=matmul_dtype)
    return bert_self_output(
        self_out, input_tensor,
        params["wo"], params["bo"], params["gamma"], params["beta"],
        tm=tm, matmul_dtype=matmul_dtype)


# --------------------------- pure-JAX reference ---------------------------
def _reference(input_tensor, attention_mask, params, *, num_heads, matmul_dtype):
    B, S, H = input_tensor.shape
    dh = H // num_heads

    def linear(x, w, b):
        return jnp.einsum("bsh,ho->bso", x.astype(matmul_dtype),
                          w.T.astype(matmul_dtype),
                          preferred_element_type=jnp.float32) + b.astype(jnp.float32)

    q = linear(input_tensor, params["wq"], params["bq"])
    k = linear(input_tensor, params["wk"], params["bk"])
    v = linear(input_tensor, params["wv"], params["bv"])

    def split(x):
        return x.reshape(B, S, num_heads, dh).transpose(0, 2, 1, 3)

    qh, kh, vh = split(q), split(k), split(v)
    scores = jnp.einsum("bhqd,bhkd->bhqk", qh, kh) / math.sqrt(dh)
    scores = scores + attention_mask.reshape(B, 1, 1, S).astype(jnp.float32)
    probs = jax.nn.softmax(scores, axis=-1)
    ctx = jnp.einsum("bhqk,bhkd->bhqd", probs, vh)
    ctx = ctx.transpose(0, 2, 1, 3).reshape(B, S, H)

    h = jnp.einsum("bsh,ho->bso", ctx.astype(matmul_dtype),
                   params["wo"].T.astype(matmul_dtype),
                   preferred_element_type=jnp.float32) + params["bo"]
    x = h + input_tensor.astype(jnp.float32)
    u = jnp.mean(x, axis=-1, keepdims=True)
    s = jnp.mean((x - u) ** 2, axis=-1, keepdims=True)
    xn = (x - u) / jnp.sqrt(s + LN_EPS)
    return params["gamma"] * xn + params["beta"]


if __name__ == "__main__":
    # Small demo shapes (production H is a multiple of 128 -> lane-dense stores).
    B, S, H, NH = 2, 8, 32, 4
    key = jax.random.PRNGKey(0)
    keys = jax.random.split(key, 9)

    input_tensor = jax.random.normal(keys[0], (B, S, H), dtype=jnp.float32)
    # HF/BERT-style additive mask: 0 for keep, -10000 for masked key positions.
    keep = jnp.ones((B, S), dtype=jnp.float32).at[1, S - 2:].set(0.0)
    attention_mask = ((1.0 - keep) * -10000.0).reshape(B, 1, 1, S)

    bound = 1.0 / math.sqrt(H)

    def lin_init(kw, kb):
        w = jax.random.uniform(kw, (H, H), minval=-bound, maxval=bound, dtype=jnp.float32)
        b = jax.random.uniform(kb, (H,), minval=-bound, maxval=bound, dtype=jnp.float32)
        return w, b

    wq, bq = lin_init(keys[1], keys[2])
    wk, bk = lin_init(keys[3], keys[4])
    wv, bv = lin_init(keys[5], keys[6])
    wo, bo = lin_init(keys[7], keys[8])
    gamma = jnp.ones((H,), dtype=jnp.float32)   # BertLayerNorm.weight
    beta = jnp.zeros((H,), dtype=jnp.float32)   # BertLayerNorm.bias

    params = dict(wq=wq, bq=bq, wk=wk, bk=bk, wv=wv, bv=bv,
                  wo=wo, bo=bo, gamma=gamma, beta=beta)

    out = bert_attention(input_tensor, attention_mask, params, num_heads=NH)
    out = jax.block_until_ready(out)

    ref = _reference(input_tensor, attention_mask, params,
                     num_heads=NH, matmul_dtype=jnp.bfloat16)
    assert out.shape == (B, S, H)
    assert jnp.allclose(out, ref, atol=1e-2, rtol=1e-2), (
        "mismatch vs reference: max abs err = %e"
        % float(jnp.max(jnp.abs(out - ref))))

    print("KERNEL_OK")
</pallas_src>

<mosaic_0001>
module attributes {stable_mosaic.version = 11 : i64} {
  func.func @_self_attention_kernel(%arg0: i32, %arg1: memref<1x8x32xbf16, #tpu.memory_space<vmem>>, %arg2: memref<1x1x8xf32, #tpu.memory_space<vmem>>, %arg3: memref<32x32xbf16, #tpu.memory_space<vmem>>, %arg4: memref<1x32xf32, #tpu.memory_space<vmem>>, %arg5: memref<32x32xbf16, #tpu.memory_space<vmem>>, %arg6: memref<1x32xf32, #tpu.memory_space<vmem>>, %arg7: memref<32x32xbf16, #tpu.memory_space<vmem>>, %arg8: memref<1x32xf32, #tpu.memory_space<vmem>>, %arg9: memref<1x8x32xf32, #tpu.memory_space<vmem>>) attributes {dimension_semantics = [#tpu.dimension_semantics<parallel>], iteration_bounds = array<i64: 2>, scalar_prefetch = 0 : i64, scratch_operands = 0 : i64, tpu.core_type = #tpu.core_type<tc>, window_params = [{transform_indices = @transform_0, window_bounds = array<i64: 1, 8, 32>}, {transform_indices = @transform_1, window_bounds = array<i64: 1, 1, 8>}, {pipeline_mode = #tpu.pipeline_mode<synchronous>, transform_indices = @transform_2, window_bounds = array<i64: 32, 32>}, {pipeline_mode = #tpu.pipeline_mode<synchronous>, transform_indices = @transform_3, window_bounds = array<i64: 1, 32>}, {pipeline_mode = #tpu.pipeline_mode<synchronous>, transform_indices = @transform_4, window_bounds = array<i64: 32, 32>}, {pipeline_mode = #tpu.pipeline_mode<synchronous>, transform_indices = @transform_5, window_bounds = array<i64: 1, 32>}, {pipeline_mode = #tpu.pipeline_mode<synchronous>, transform_indices = @transform_6, window_bounds = array<i64: 32, 32>}, {pipeline_mode = #tpu.pipeline_mode<synchronous>, transform_indices = @transform_7, window_bounds = array<i64: 1, 32>}, {transform_indices = @transform_8, window_bounds = array<i64: 1, 8, 32>}]} {
    %c0 = arith.constant 0 : index
    %c0_0 = arith.constant 0 : index
    %c0_1 = arith.constant 0 : index
    %0 = vector.load %arg1[%c0, %c0_0, %c0_1] : memref<1x8x32xbf16, #tpu.memory_space<vmem>>, vector<1x8x32xbf16>
    %1 = vector.shape_cast %0 : vector<1x8x32xbf16> to vector<8x32xbf16>
    %c0_2 = arith.constant 0 : index
    %c0_3 = arith.constant 0 : index
    %2 = vector.load %arg3[%c0_2, %c0_3] : memref<32x32xbf16, #tpu.memory_space<vmem>>, vector<32x32xbf16>
    %cst = arith.constant dense<0.000000e+00> : vector<8x32xf32>
    %3 = tpu.matmul %1, %2, %cst {dimension_numbers = #tpu.dot_dimension_numbers<[1], [0], [0], [1], [0, 0, 1, 1], [], []>} : vector<8x32xbf16>, vector<32x32xbf16>, vector<8x32xf32> -> vector<8x32xf32>
    %c0_4 = arith.constant 0 : index
    %c0_5 = arith.constant 0 : index
    %4 = vector.load %arg4[%c0_4, %c0_5] : memref<1x32xf32, #tpu.memory_space<vmem>>, vector<1x32xf32>
    %5 = vector.broadcast %4 : vector<1x32xf32> to vector<8x32xf32>
    %6 = arith.addf %3, %5 : vector<8x32xf32>
    %c0_6 = arith.constant 0 : index
    %c0_7 = arith.constant 0 : index
    %7 = vector.load %arg5[%c0_6, %c0_7] : memref<32x32xbf16, #tpu.memory_space<vmem>>, vector<32x32xbf16>
    %cst_8 = arith.constant dense<0.000000e+00> : vector<8x32xf32>
    %8 = tpu.matmul %1, %7, %cst_8 {dimension_numbers = #tpu.dot_dimension_numbers<[1], [0], [0], [1], [0, 0, 1, 1], [], []>} : vector<8x32xbf16>, vector<32x32xbf16>, vector<8x32xf32> -> vector<8x32xf32>
    %c0_9 = arith.constant 0 : index
    %c0_10 = arith.constant 0 : index
    %9 = vector.load %arg6[%c0_9, %c0_10] : memref<1x32xf32, #tpu.memory_space<vmem>>, vector<1x32xf32>
    %10 = vector.broadcast %9 : vector<1x32xf32> to vector<8x32xf32>
    %11 = arith.addf %8, %10 : vector<8x32xf32>
    %c0_11 = arith.constant 0 : index
    %c0_12 = arith.constant 0 : index
    %12 = vector.load %arg7[%c0_11, %c0_12] : memref<32x32xbf16, #tpu.memory_space<vmem>>, vector<32x32xbf16>
    %cst_13 = arith.constant dense<0.000000e+00> : vector<8x32xf32>
    %13 = tpu.matmul %1, %12, %cst_13 {dimension_numbers = #tpu.dot_dimension_numbers<[1], [0], [0], [1], [0, 0, 1, 1], [], []>} : vector<8x32xbf16>, vector<32x32xbf16>, vector<8x32xf32> -> vector<8x32xf32>
    %c0_14 = arith.constant 0 : index
    %c0_15 = arith.constant 0 : index
    %14 = vector.load %arg8[%c0_14, %c0_15] : memref<1x32xf32, #tpu.memory_space<vmem>>, vector<1x32xf32>
    %15 = vector.broadcast %14 : vector<1x32xf32> to vector<8x32xf32>
    %16 = arith.addf %13, %15 : vector<8x32xf32>
    %c0_16 = arith.constant 0 : index
    %c0_17 = arith.constant 0 : index
    %c0_18 = arith.constant 0 : index
    %17 = vector.load %arg2[%c0_16, %c0_17, %c0_18] : memref<1x1x8xf32, #tpu.memory_space<vmem>>, vector<1x1x8xf32>
    %18 = vector.shape_cast %17 : vector<1x1x8xf32> to vector<1x8xf32>
    %19 = vector.extract_strided_slice %6 {offsets = [0, 0], sizes = [8, 8], strides = [1, 1]} : vector<8x32xf32> to vector<8x8xf32>
    %20 = vector.extract_strided_slice %11 {offsets = [0, 0], sizes = [8, 8], strides = [1, 1]} : vector<8x32xf32> to vector<8x8xf32>
    %21 = vector.extract_strided_slice %16 {offsets = [0, 0], sizes = [8, 8], strides = [1, 1]} : vector<8x32xf32> to vector<8x8xf32>
    %22 = tpu.transpose %20, [1, 0] : vector<8x8xf32> -> vector<8x8xf32>
    %cst_19 = arith.constant dense<0.000000e+00> : vector<8x8xf32>
    %23 = tpu.matmul %19, %22, %cst_19 {dimension_numbers = #tpu.dot_dimension_numbers<[1], [0], [0], [1], [0, 0, 1, 1], [], []>} : vector<8x8xf32>, vector<8x8xf32>, vector<8x8xf32> -> vector<8x8xf32>
    %cst_20 = arith.constant 0.353553385 : f32
    %24 = vector.broadcast %cst_20 : f32 to vector<8x8xf32>
    %25 = arith.mulf %23, %24 : vector<8x8xf32>
    %26 = vector.broadcast %18 : vector<1x8xf32> to vector<8x8xf32>
    %27 = arith.addf %25, %26 : vector<8x8xf32>
    %cst_21 = arith.constant dense<0xFF800000> : vector<8xf32>
    %28 = vector.multi_reduction <maximumf>, %27, %cst_21 [1] : vector<8x8xf32> to vector<8xf32>
    %29 = vector.shape_cast %28 : vector<8xf32> to vector<8x1xf32>
    %30 = vector.broadcast %29 : vector<8x1xf32> to vector<8x8xf32>
    %31 = arith.subf %27, %30 : vector<8x8xf32>
    %32 = math.exp %31 : vector<8x8xf32>
    %cst_22 = arith.constant dense<0.000000e+00> : vector<8xf32>
    %33 = vector.multi_reduction <add>, %32, %cst_22 [1] : vector<8x8xf32> to vector<8xf32>
    %34 = vector.shape_cast %33 : vector<8xf32> to vector<8x1xf32>
    %35 = vector.broadcast %34 : vector<8x1xf32> to vector<8x8xf32>
    %36 = arith.divf %32, %35 : vector<8x8xf32>
    %cst_23 = arith.constant dense<0.000000e+00> : vector<8x8xf32>
    %37 = tpu.matmul %36, %21, %cst_23 {dimension_numbers = #tpu.dot_dimension_numbers<[1], [0], [0], [1], [0, 0, 1, 1], [], []>} : vector<8x8xf32>, vector<8x8xf32>, vector<8x8xf32> -> vector<8x8xf32>
    %38 = vector.extract_strided_slice %6 {offsets = [0, 8], sizes = [8, 8], strides = [1, 1]} : vector<8x32xf32> to vector<8x8xf32>
    %39 = vector.extract_strided_slice %11 {offsets = [0, 8], sizes = [8, 8], strides = [1, 1]} : vector<8x32xf32> to vector<8x8xf32>
    %40 = vector.extract_strided_slice %16 {offsets = [0, 8], sizes = [8, 8], strides = [1, 1]} : vector<8x32xf32> to vector<8x8xf32>
    %41 = tpu.transpose %39, [1, 0] : vector<8x8xf32> -> vector<8x8xf32>
    %cst_24 = arith.constant dense<0.000000e+00> : vector<8x8xf32>
    %42 = tpu.matmul %38, %41, %cst_24 {dimension_numbers = #tpu.dot_dimension_numbers<[1], [0], [0], [1], [0, 0, 1, 1], [], []>} : vector<8x8xf32>, vector<8x8xf32>, vector<8x8xf32> -> vector<8x8xf32>
    %cst_25 = arith.constant 0.353553385 : f32
    %43 = vector.broadcast %cst_25 : f32 to vector<8x8xf32>
    %44 = arith.mulf %42, %43 : vector<8x8xf32>
    %45 = vector.broadcast %18 : vector<1x8xf32> to vector<8x8xf32>
    %46 = arith.addf %44, %45 : vector<8x8xf32>
    %cst_26 = arith.constant dense<0xFF800000> : vector<8xf32>
    %47 = vector.multi_reduction <maximumf>, %46, %cst_26 [1] : vector<8x8xf32> to vector<8xf32>
    %48 = vector.shape_cast %47 : vector<8xf32> to vector<8x1xf32>
    %49 = vector.broadcast %48 : vector<8x1xf32> to vector<8x8xf32>
    %50 = arith.subf %46, %49 : vector<8x8xf32>
    %51 = math.exp %50 : vector<8x8xf32>
    %cst_27 = arith.constant dense<0.000000e+00> : vector<8xf32>
    %52 = vector.multi_reduction <add>, %51, %cst_27 [1] : vector<8x8xf32> to vector<8xf32>
    %53 = vector.shape_cast %52 : vector<8xf32> to vector<8x1xf32>
    %54 = vector.broadcast %53 : vector<8x1xf32> to vector<8x8xf32>
    %55 = arith.divf %51, %54 : vector<8x8xf32>
    %cst_28 = arith.constant dense<0.000000e+00> : vector<8x8xf32>
    %56 = tpu.matmul %55, %40, %cst_28 {dimension_numbers = #tpu.dot_dimension_numbers<[1], [0], [0], [1], [0, 0, 1, 1], [], []>} : vector<8x8xf32>, vector<8x8xf32>, vector<8x8xf32> -> vector<8x8xf32>
    %57 = vector.extract_strided_slice %6 {offsets = [0, 16], sizes = [8, 8], strides = [1, 1]} : vector<8x32xf32> to vector<8x8xf32>
    %58 = vector.extract_strided_slice %11 {offsets = [0, 16], sizes = [8, 8], strides = [1, 1]} : vector<8x32xf32> to vector<8x8xf32>
    %59 = vector.extract_strided_slice %16 {offsets = [0, 16], sizes = [8, 8], strides = [1, 1]} : vector<8x32xf32> to vector<8x8xf32>
    %60 = tpu.transpose %58, [1, 0] : vector<8x8xf32> -> vector<8x8xf32>
    %cst_29 = arith.constant dense<0.000000e+00> : vector<8x8xf32>
    %61 = tpu.matmul %57, %60, %cst_29 {dimension_numbers = #tpu.dot_dimension_numbers<[1], [0], [0], [1], [0, 0, 1, 1], [], []>} : vector<8x8xf32>, vector<8x8xf32>, vector<8x8xf32> -> vector<8x8xf32>
    %cst_30 = arith.constant 0.353553385 : f32
    %62 = vector.broadcast %cst_30 : f32 to vector<8x8xf32>
    %63 = arith.mulf %61, %62 : vector<8x8xf32>
    %64 = vector.broadcast %18 : vector<1x8xf32> to vector<8x8xf32>
    %65 = arith.addf %63, %64 : vector<8x8xf32>
    %cst_31 = arith.constant dense<0xFF800000> : vector<8xf32>
    %66 = vector.multi_reduction <maximumf>, %65, %cst_31 [1] : vector<8x8xf32> to vector<8xf32>
    %67 = vector.shape_cast %66 : vector<8xf32> to vector<8x1xf32>
    %68 = vector.broadcast %67 : vector<8x1xf32> to vector<8x8xf32>
    %69 = arith.subf %65, %68 : vector<8x8xf32>
    %70 = math.exp %69 : vector<8x8xf32>
    %cst_32 = arith.constant dense<0.000000e+00> : vector<8xf32>
    %71 = vector.multi_reduction <add>, %70, %cst_32 [1] : vector<8x8xf32> to vector<8xf32>
    %72 = vector.shape_cast %71 : vector<8xf32> to vector<8x1xf32>
    %73 = vector.broadcast %72 : vector<8x1xf32> to vector<8x8xf32>
    %74 = arith.divf %70, %73 : vector<8x8xf32>
    %cst_33 = arith.constant dense<0.000000e+00> : vector<8x8xf32>
    %75 = tpu.matmul %74, %59, %cst_33 {dimension_numbers = #tpu.dot_dimension_numbers<[1], [0], [0], [1], [0, 0, 1, 1], [], []>} : vector<8x8xf32>, vector<8x8xf32>, vector<8x8xf32> -> vector<8x8xf32>
    %76 = vector.extract_strided_slice %6 {offsets = [0, 24], sizes = [8, 8], strides = [1, 1]} : vector<8x32xf32> to vector<8x8xf32>
    %77 = vector.extract_strided_slice %11 {offsets = [0, 24], sizes = [8, 8], strides = [1, 1]} : vector<8x32xf32> to vector<8x8xf32>
    %78 = vector.extract_strided_slice %16 {offsets = [0, 24], sizes = [8, 8], strides = [1, 1]} : vector<8x32xf32> to vector<8x8xf32>
    %79 = tpu.transpose %77, [1, 0] : vector<8x8xf32> -> vector<8x8xf32>
    %cst_34 = arith.constant dense<0.000000e+00> : vector<8x8xf32>
    %80 = tpu.matmul %76, %79, %cst_34 {dimension_numbers = #tpu.dot_dimension_numbers<[1], [0], [0], [1], [0, 0, 1, 1], [], []>} : vector<8x8xf32>, vector<8x8xf32>, vector<8x8xf32> -> vector<8x8xf32>
    %cst_35 = arith.constant 0.353553385 : f32
    %81 = vector.broadcast %cst_35 : f32 to vector<8x8xf32>
    %82 = arith.mulf %80, %81 : vector<8x8xf32>
    %83 = vector.broadcast %18 : vector<1x8xf32> to vector<8x8xf32>
    %84 = arith.addf %82, %83 : vector<8x8xf32>
    %cst_36 = arith.constant dense<0xFF800000> : vector<8xf32>
    %85 = vector.multi_reduction <maximumf>, %84, %cst_36 [1] : vector<8x8xf32> to vector<8xf32>
    %86 = vector.shape_cast %85 : vector<8xf32> to vector<8x1xf32>
    %87 = vector.broadcast %86 : vector<8x1xf32> to vector<8x8xf32>
    %88 = arith.subf %84, %87 : vector<8x8xf32>
    %89 = math.exp %88 : vector<8x8xf32>
    %cst_37 = arith.constant dense<0.000000e+00> : vector<8xf32>
    %90 = vector.multi_reduction <add>, %89, %cst_37 [1] : vector<8x8xf32> to vector<8xf32>
    %91 = vector.shape_cast %90 : vector<8xf32> to vector<8x1xf32>
    %92 = vector.broadcast %91 : vector<8x1xf32> to vector<8x8xf32>
    %93 = arith.divf %89, %92 : vector<8x8xf32>
    %cst_38 = arith.constant dense<0.000000e+00> : vector<8x8xf32>
    %94 = tpu.matmul %93, %78, %cst_38 {dimension_numbers = #tpu.dot_dimension_numbers<[1], [0], [0], [1], [0, 0, 1, 1], [], []>} : vector<8x8xf32>, vector<8x8xf32>, vector<8x8xf32> -> vector<8x8xf32>
    %95 = tpu.concatenate %37, %56, %75, %94 in 1 : vector<8x8xf32>, vector<8x8xf32>, vector<8x8xf32>, vector<8x8xf32> -> vector<8x32xf32>
    %c0_39 = arith.constant 0 : index
    %c0_40 = arith.constant 0 : index
    %c0_41 = arith.constant 0 : index
    %96 = vector.load %arg9[%c0_39, %c0_40, %c0_41] : memref<1x8x32xf32, #tpu.memory_space<vmem>>, vector<1x8x32xf32>
    %97 = vector.shape_cast %96 : vector<1x8x32xf32> to vector<8x32xf32>
    %98 = vector.shape_cast %95 : vector<8x32xf32> to vector<1x8x32xf32>
    tpu.vector_store %arg9[%c0_39, %c0_40, %c0_41], %98 {strides = array<i32>} : memref<1x8x32xf32, #tpu.memory_space<vmem>>, vector<1x8x32xf32>,
    return
  }
  func.func @transform_0(%arg0: i32) -> (i32, i32, i32) {
    %c0_i32 = arith.constant 0 : i32
    %c0_i32_0 = arith.constant 0 : i32
    %c0_i32_1 = arith.constant 0 : i32
    return %arg0, %c0_i32, %c0_i32_0 : i32, i32, i32
  }
  func.func @transform_1(%arg0: i32) -> (i32, i32, i32) {
    %c0_i32 = arith.constant 0 : i32
    %c0_i32_0 = arith.constant 0 : i32
    %c0_i32_1 = arith.constant 0 : i32
    return %arg0, %c0_i32, %c0_i32_0 : i32, i32, i32
  }
  func.func @transform_2(%arg0: i32) -> (i32, i32) {
    %c0_i32 = arith.constant 0 : i32
    %c0_i32_0 = arith.constant 0 : i32
    %c0_i32_1 = arith.constant 0 : i32
    return %c0_i32, %c0_i32_0 : i32, i32
  }
  func.func @transform_3(%arg0: i32) -> (i32, i32) {
    %c0_i32 = arith.constant 0 : i32
    %c0_i32_0 = arith.constant 0 : i32
    %c0_i32_1 = arith.constant 0 : i32
    return %c0_i32, %c0_i32_0 : i32, i32
  }
  func.func @transform_4(%arg0: i32) -> (i32, i32) {
    %c0_i32 = arith.constant 0 : i32
    %c0_i32_0 = arith.constant 0 : i32
    %c0_i32_1 = arith.constant 0 : i32
    return %c0_i32, %c0_i32_0 : i32, i32
  }
  func.func @transform_5(%arg0: i32) -> (i32, i32) {
    %c0_i32 = arith.constant 0 : i32
    %c0_i32_0 = arith.constant 0 : i32
    %c0_i32_1 = arith.constant 0 : i32
    return %c0_i32, %c0_i32_0 : i32, i32
  }
  func.func @transform_6(%arg0: i32) -> (i32, i32) {
    %c0_i32 = arith.constant 0 : i32
    %c0_i32_0 = arith.constant 0 : i32
    %c0_i32_1 = arith.constant 0 : i32
    return %c0_i32, %c0_i32_0 : i32, i32
  }
  func.func @transform_7(%arg0: i32) -> (i32, i32) {
    %c0_i32 = arith.constant 0 : i32
    %c0_i32_0 = arith.constant 0 : i32
    %c0_i32_1 = arith.constant 0 : i32
    return %c0_i32, %c0_i32_0 : i32, i32
  }
  func.func @transform_8(%arg0: i32) -> (i32, i32, i32) {
    %c0_i32 = arith.constant 0 : i32
    %c0_i32_0 = arith.constant 0 : i32
    %c0_i32_1 = arith.constant 0 : i32
    return %arg0, %c0_i32, %c0_i32_0 : i32, i32, i32
  }
}

</mosaic_0001>

<llo_original>
// kernel: tpu_custom_call.1
$region0: #{tpu_custom_call.1}
  #allocation0 [shape = 'u32[]', space=smem, size = 0x4, offset = 0x4, fixed_abs, tag = 'smem constant byte address 0x4 - core index']
  #allocation1 [shape = 'u32[144,128]{1,0:T(1,128)}', space=vmem, size = 0x12000, scoped, tag = 'internal scratch']
  %s0 = inlined_call_operand.hbm [shape: bf16[2,8,32], index: 0, kind: input, shape index: {}]
  %s1 = inlined_call_operand.hbm [shape: f32[2,1,8], index: 1, kind: input, shape index: {}]
  %s2 = inlined_call_operand.hbm [shape: bf16[32,32], index: 2, kind: input, shape index: {}]
  %s3 = inlined_call_operand.vmem [shape: f32[1,32], index: 3, kind: input, shape index: {}]
  %s4 = inlined_call_operand.hbm [shape: bf16[32,32], index: 4, kind: input, shape index: {}]
  %s5 = inlined_call_operand.vmem [shape: f32[1,32], index: 5, kind: input, shape index: {}]
  %s6 = inlined_call_operand.hbm [shape: bf16[32,32], index: 6, kind: input, shape index: {}]
  %s7 = inlined_call_operand.vmem [shape: f32[1,32], index: 7, kind: input, shape index: {}]
  %s8 = inlined_call_operand.hbm [shape: f32[2,8,32], index: 8, kind: output, shape index: {}]
  %s9 = sld [smem:[#allocation0]]
  $region85: #{tpu_custom_call.1} parent=0
    _
  %s11 = ssub.s32 1, %s9
  %s12 = scalar_select 0, %s11, %s9
  $region1: #{tpu_custom_call.1} parent=0
    #allocation2 [shape = 'u8[4096]{0}', space=vmem, size = 0x1000, scoped, tag = 'input window, operand 0']
    #allocation3 [shape = 's32[2]{0}', space=sflag, size = 0x8, scoped, tag = 'scoped memory for tpu_custom_call.1']
    #allocation4 [shape = 's32[2]{0}', space=sflag, size = 0x8, scoped, tag = 'scoped memory for tpu_custom_call.1']
    #allocation5 [shape = 'u8[1024]{0}', space=vmem, size = 0x400, scoped, tag = 'input window, operand 1']
    #allocation6 [shape = 's32[2]{0}', space=sflag, size = 0x8, scoped, tag = 'scoped memory for tpu_custom_call.1']
    #allocation7 [shape = 'u8[8192]{0}', space=vmem, size = 0x2000, scoped, tag = 'input window, operand 2, single buffered']
    #allocation8 [shape = 'u8[8192]{0}', space=vmem, size = 0x2000, scoped, tag = 'input window, operand 4, single buffered']
    #allocation9 [shape = 's32[1]{0}', space=sflag, size = 0x4, scoped, tag = 'scoped memory for tpu_custom_call.1']
    #allocation10 [shape = 'u8[8192]{0}', space=vmem, size = 0x2000, scoped, tag = 'input window, operand 6, single buffered']
    #allocation11 [shape = 'u8[8192]{0}', space=vmem, size = 0x2000, scoped, tag = 'output window, operand 0']
    %13 = vsyncpa [#allocation3], 0
    %s14 = scalar_lea.sflag [#allocation3], 1
    %15 = vsyncpa %s14, 0
    %16 = vsyncpa [#allocation6], 0
    %s17 = scalar_lea.sflag [#allocation6], 1
    %18 = vsyncpa %s17, 0
    %19 = vsyncpa [#allocation9], 0
    %20 = vsyncpa [#allocation4], 0
    %s21 = scalar_lea.sflag [#allocation4], 1
    %22 = vsyncpa %s21, 0
    loop: start=0, step=1, limit=4
    $region2: #{tpu_custom_call.1} parent=1 // loop_pre_header
      _
    $region3: #{tpu_custom_call.1} parent=1 // loop_header
      %s24 = sphi 0, %s28
      %p25 = scmp.ge.s32.totalorder %s24, 4
      %s34 = sphi 0, %s36
      %s37 = sphi 0, %s34
      %s38 = sphi 0, %s37
      %s54 = sphi 0, %s38
      %s60 = sphi 0, %s62
      %s63 = sphi 0, %s60
      %s64 = sphi 0, %s63
      %s80 = sphi 0, %s64
      %s84 = sphi 0, %s84
      %s86 = sphi 0, %s84
      %s87 = sphi 0, %s86
      %s101 = sphi 0, %s87
      %s105 = sphi 0, %s105
      %s107 = sphi 0, %s105
      %s108 = sphi 0, %s107
      %s122 = sphi 0, %s108
      %s126 = sphi 0, %s126
      %s128 = sphi 0, %s126
      %s129 = sphi 0, %s128
      %s143 = sphi 0, %s129
      %s147 = sphi 0, %s147
      %s149 = sphi 0, %s147
      %s150 = sphi 0, %s149
      %s164 = sphi 0, %s150
      %s168 = sphi 0, %s168
      %s170 = sphi 0, %s168
      %s171 = sphi 0, %s170
      %s185 = sphi 0, %s171
      %s189 = sphi 0, %s189
      %s191 = sphi 0, %s189
      %s192 = sphi 0, %s191
      %s206 = sphi 0, %s192
      %s212 = sphi 0, %s214
      %s215 = sphi 0, %s212
      %s216 = sphi 0, %s215
      %s232 = sphi 0, %s216
    $region4: #{tpu_custom_call.1} parent=1 // loop_header_branch
      %27 = sbr.rel (%p25) target = $region8
    $region5: #{tpu_custom_call.1} parent=1 // loop_body
      %s29 = ssub.s32 %s24, 1
      %s30 = ssub.s32 %s24, 2
      %s31 = sadd.s32 %s24, 1
      %s32 = ssub.s32 %s24, %s31
      %p33 = scmp.eq.s32.totalorder %s32, 0
      %s35 = sadd.s32 %s34, 1
      %s36 = scalar_select %p33, %s34, %s35
      %p39 = pneg %p33
      %p40 = scmp.eq.s32.totalorder %s24, 1
      %p41 = por %p39, %p40
      %p42 = scmp.ne.s32.totalorder %s34, %s37
      %p43 = scmp.eq.s32.totalorder %s24, 0
      %p44 = por %p42, %p43
      %p45 = scmp.ne.s32.totalorder %s34, %s37
      %p46 = scmp.eq.s32.totalorder %s29, 1
      %p47 = por %p45, %p46
      %p48 = scmp.ne.s32.totalorder %s37, %s38
      %p49 = scmp.eq.s32.totalorder %s29, 0
      %p50 = por %p48, %p49
      %p51 = scmp.ne.s32.totalorder %s37, %s38
      %p52 = scmp.eq.s32.totalorder %s30, 1
      %p53 = por %p51, %p52
      %p55 = scmp.ne.s32.totalorder %s38, %s54
      %p56 = scmp.eq.s32.totalorder %s30, 0
      %p57 = por %p55, %p56
      %s58 = ssub.s32 %s24, %s31
      %p59 = scmp.eq.s32.totalorder %s58, 0
      %s61 = sadd.s32 %s60, 1
      %s62 = scalar_select %p59, %s60, %s61
      %p65 = pneg %p59
      %p66 = scmp.eq.s32.totalorder %s24, 1
      %p67 = por %p65, %p66
      %p68 = scmp.ne.s32.totalorder %s60, %s63
      %p69 = scmp.eq.s32.totalorder %s24, 0
      %p70 = por %p68, %p69
      %p71 = scmp.ne.s32.totalorder %s60, %s63
      %p72 = scmp.eq.s32.totalorder %s29, 1
      %p73 = por %p71, %p72
      %p74 = scmp.ne.s32.totalorder %s63, %s64
      %p75 = scmp.eq.s32.totalorder %s29, 0
      %p76 = por %p74, %p75
      %p77 = scmp.ne.s32.totalorder %s63, %s64
      %p78 = scmp.eq.s32.totalorder %s30, 1
      %p79 = por %p77, %p78
      %p81 = scmp.ne.s32.totalorder %s64, %s80
      %p82 = scmp.eq.s32.totalorder %s30, 0
      %p83 = por %p81, %p82
      %s85 = sadd.s32 %s84, 1
      %p88 = scmp.eq.s32.totalorder %s24, 1
      %p89 = scmp.ne.s32.totalorder %s84, %s86
      %p90 = scmp.eq.s32.totalorder %s24, 0
      %p91 = por %p89, %p90
      %p92 = scmp.ne.s32.totalorder %s84, %s86
      %p93 = scmp.eq.s32.totalorder %s29, 1
      %p94 = por %p92, %p93
      %p95 = scmp.ne.s32.totalorder %s86, %s87
      %p96 = scmp.eq.s32.totalorder %s29, 0
      %p97 = por %p95, %p96
      %p98 = scmp.ne.s32.totalorder %s86, %s87
      %p99 = scmp.eq.s32.totalorder %s30, 1
      %p100 = por %p98, %p99
      %p102 = scmp.ne.s32.totalorder %s87, %s101
      %p103 = scmp.eq.s32.totalorder %s30, 0
      %p104 = por %p102, %p103
      %s106 = sadd.s32 %s105, 1
      %p109 = scmp.eq.s32.totalorder %s24, 1
      %p110 = scmp.ne.s32.totalorder %s105, %s107
      %p111 = scmp.eq.s32.totalorder %s24, 0
      %p112 = por %p110, %p111
      %p113 = scmp.ne.s32.totalorder %s105, %s107
      %p114 = scmp.eq.s32.totalorder %s29, 1
      %p115 = por %p113, %p114
      %p116 = scmp.ne.s32.totalorder %s107, %s108
      %p117 = scmp.eq.s32.totalorder %s29, 0
      %p118 = por %p116, %p117
      %p119 = scmp.ne.s32.totalorder %s107, %s108
      %p120 = scmp.eq.s32.totalorder %s30, 1
      %p121 = por %p119, %p120
      %p123 = scmp.ne.s32.totalorder %s108, %s122
      %p124 = scmp.eq.s32.totalorder %s30, 0
      %p125 = por %p123, %p124
      %s127 = sadd.s32 %s126, 1
      %p130 = scmp.eq.s32.totalorder %s24, 1
      %p131 = scmp.ne.s32.totalorder %s126, %s128
      %p132 = scmp.eq.s32.totalorder %s24, 0
      %p133 = por %p131, %p132
      %p134 = scmp.ne.s32.totalorder %s126, %s128
      %p135 = scmp.eq.s32.totalorder %s29, 1
      %p136 = por %p134, %p135
      %p137 = scmp.ne.s32.totalorder %s128, %s129
      %p138 = scmp.eq.s32.totalorder %s29, 0
      %p139 = por %p137, %p138
      %p140 = scmp.ne.s32.totalorder %s128, %s129
      %p141 = scmp.eq.s32.totalorder %s30, 1
      %p142 = por %p140, %p141
      %p144 = scmp.ne.s32.totalorder %s129, %s143
      %p145 = scmp.eq.s32.totalorder %s30, 0
      %p146 = por %p144, %p145
      %s148 = sadd.s32 %s147, 1
      %p151 = scmp.eq.s32.totalorder %s24, 1
      %p152 = scmp.ne.s32.totalorder %s147, %s149
      %p153 = scmp.eq.s32.totalorder %s24, 0
      %p154 = por %p152, %p153
      %p155 = scmp.ne.s32.totalorder %s147, %s149
      %p156 = scmp.eq.s32.totalorder %s29, 1
      %p157 = por %p155, %p156
      %p158 = scmp.ne.s32.totalorder %s149, %s150
      %p159 = scmp.eq.s32.totalorder %s29, 0
      %p160 = por %p158, %p159
      %p161 = scmp.ne.s32.totalorder %s149, %s150
      %p162 = scmp.eq.s32.totalorder %s30, 1
      %p163 = por %p161, %p162
      %p165 = scmp.ne.s32.totalorder %s150, %s164
      %p166 = scmp.eq.s32.totalorder %s30, 0
      %p167 = por %p165, %p166
      %s169 = sadd.s32 %s168, 1
      %p172 = scmp.eq.s32.totalorder %s24, 1
      %p173 = scmp.ne.s32.totalorder %s168, %s170
      %p174 = scmp.eq.s32.totalorder %s24, 0
      %p175 = por %p173, %p174
      %p176 = scmp.ne.s32.totalorder %s168, %s170
      %p177 = scmp.eq.s32.totalorder %s29, 1
      %p178 = por %p176, %p177
      %p179 = scmp.ne.s32.totalorder %s170, %s171
      %p180 = scmp.eq.s32.totalorder %s29, 0
      %p181 = por %p179, %p180
      %p182 = scmp.ne.s32.totalorder %s170, %s171
      %p183 = scmp.eq.s32.totalorder %s30, 1
      %p184 = por %p182, %p183
      %p186 = scmp.ne.s32.totalorder %s171, %s185
      %p187 = scmp.eq.s32.totalorder %s30, 0
      %p188 = por %p186, %p187
      %s190 = sadd.s32 %s189, 1
      %p193 = scmp.eq.s32.totalorder %s24, 1
      %p194 = scmp.ne.s32.totalorder %s189, %s191
      %p195 = scmp.eq.s32.totalorder %s24, 0
      %p196 = por %p194, %p195
      %p197 = scmp.ne.s32.totalorder %s189, %s191
      %p198 = scmp.eq.s32.totalorder %s29, 1
      %p199 = por %p197, %p198
      %p200 = scmp.ne.s32.totalorder %s191, %s192
      %p201 = scmp.eq.s32.totalorder %s29, 0
      %p202 = por %p200, %p201
      %p203 = scmp.ne.s32.totalorder %s191, %s192
      %p204 = scmp.eq.s32.totalorder %s30, 1
      %p205 = por %p203, %p204
      %p207 = scmp.ne.s32.totalorder %s192, %s206
      %p208 = scmp.eq.s32.totalorder %s30, 0
      %p209 = por %p207, %p208
      %s210 = ssub.s32 %s24, %s31
      %p211 = scmp.eq.s32.totalorder %s210, 0
      %s213 = sadd.s32 %s212, 1
      %s214 = scalar_select %p211, %s212, %s213
      %p217 = pneg %p211
      %p218 = scmp.eq.s32.totalorder %s24, 1
      %p219 = por %p217, %p218
      %p220 = scmp.ne.s32.totalorder %s212, %s215
      %p221 = scmp.eq.s32.totalorder %s24, 0
      %p222 = por %p220, %p221
      %p223 = scmp.ne.s32.totalorder %s212, %s215
      %p224 = scmp.eq.s32.totalorder %s29, 1
      %p225 = por %p223, %p224
      %p226 = scmp.ne.s32.totalorder %s215, %s216
      %p227 = scmp.eq.s32.totalorder %s29, 0
      %p228 = por %p226, %p227
      %p229 = scmp.ne.s32.totalorder %s215, %s216
      %p230 = scmp.eq.s32.totalorder %s30, 1
      %p231 = por %p229, %p230
      %p233 = scmp.ne.s32.totalorder %s216, %s232
      %p234 = scmp.eq.s32.totalorder %s30, 0
      %p235 = por %p233, %p234
      %p236 = scmp.le.s32.totalorder 1, %s24
      %p237 = scmp.lt.s32.totalorder %s24, 3
      %p238 = pnand %p236, %p237
      %p239 = pneg %p238
      // Predicated region
      $region9: #{tpu_custom_call.1} parent=5 // pred_check
        _
      $region10: #{tpu_custom_call.1} parent=5 // pred_check_branch
        %241 = sbr.rel (%p238) target = $region12
      $region11: #{tpu_custom_call.1} parent=5 // pred_region
        %s242 = ssub.s32 %s24, 1
        // Predicated region
        $region13: #{tpu_custom_call.1} parent=11 // pred_check
          %p243 = pneg %p97
        $region14: #{tpu_custom_call.1} parent=11 // pred_check_branch
          %245 = sbr.rel (%p243) target = $region16
        $region15: #{tpu_custom_call.1} parent=11 // pred_region
          %s247 = ssub.s32 256, 256
          %248 = vsyncadd [#allocation6], %s247
          %s249 = sshll.u32 [#allocation7], 4
          %s250 = int_to_ptr.vmem [resolvable:$true] %s249
          %255 = dma.hbm_to_vmem [thread:$0]  %s2, 256, %s250, [#allocation6], 64, 64, 4
        $region16: #{tpu_custom_call.1} parent=11 // pred_fallthru
          _
        // Predicated region
        $region17: #{tpu_custom_call.1} parent=11 // pred_check
          %p256 = pneg %p118
        $region18: #{tpu_custom_call.1} parent=11 // pred_check_branch
          %258 = sbr.rel (%p256) target = $region20
        $region19: #{tpu_custom_call.1} parent=11 // pred_region
          _
        $region20: #{tpu_custom_call.1} parent=11 // pred_fallthru
          _
        // Predicated region
        $region21: #{tpu_custom_call.1} parent=11 // pred_check
          %p259 = pneg %p139
        $region22: #{tpu_custom_call.1} parent=11 // pred_check_branch
          %261 = sbr.rel (%p259) target = $region24
        $region23: #{tpu_custom_call.1} parent=11 // pred_region
          %s263 = ssub.s32 256, 256
          %264 = vsyncadd [#allocation9], %s263
          %s265 = sshll.u32 [#allocation8], 4
          %s266 = int_to_ptr.vmem [resolvable:$true] %s265
          %271 = dma.hbm_to_vmem [thread:$0]  %s4, 256, %s266, [#allocation9], 64, 64, 4
        $region24: #{tpu_custom_call.1} parent=11 // pred_fallthru
          _
        // Predicated region
        $region25: #{tpu_custom_call.1} parent=11 // pred_check
          %p272 = pneg %p160
        $region26: #{tpu_custom_call.1} parent=11 // pred_check_branch
          %274 = sbr.rel (%p272) target = $region28
        $region27: #{tpu_custom_call.1} parent=11 // pred_region
          _
        $region28: #{tpu_custom_call.1} parent=11 // pred_fallthru
          _
        // Predicated region
        $region29: #{tpu_custom_call.1} parent=11 // pred_check
          %p275 = pneg %p181
        $region30: #{tpu_custom_call.1} parent=11 // pred_check_branch
          %277 = sbr.rel (%p275) target = $region32
        $region31: #{tpu_custom_call.1} parent=11 // pred_region
          %s279 = ssub.s32 256, 256
          %280 = vsyncadd [#allocation9], %s279
          %s281 = sshll.u32 [#allocation10], 4
          %s282 = int_to_ptr.vmem [resolvable:$true] %s281
          %287 = dma.hbm_to_vmem [thread:$0]  %s6, 256, %s282, [#allocation9], 64, 64, 4
        $region32: #{tpu_custom_call.1} parent=11 // pred_fallthru
          _
        // Predicated region
        $region33: #{tpu_custom_call.1} parent=11 // pred_check
          %p288 = pneg %p202
        $region34: #{tpu_custom_call.1} parent=11 // pred_check_branch
          %290 = sbr.rel (%p288) target = $region36
        $region35: #{tpu_custom_call.1} parent=11 // pred_region
          _
        $region36: #{tpu_custom_call.1} parent=11 // pred_fallthru
          _
      $region12: #{tpu_custom_call.1} parent=5 // pred_fallthru
        _
      %p291 = scmp.lt.s32.totalorder %s24, 2
      // Predicated region
      $region37: #{tpu_custom_call.1} parent=5 // pred_check
        %p292 = pneg %p291
      $region38: #{tpu_custom_call.1} parent=5 // pred_check_branch
        %294 = sbr.rel (%p292) target = $region40
      $region39: #{tpu_custom_call.1} parent=5 // pred_region
        // Predicated region
        $region41: #{tpu_custom_call.1} parent=39 // pred_check
          %p295 = pneg %p44
        $region42: #{tpu_custom_call.1} parent=39 // pred_check_branch
          %297 = sbr.rel (%p295) target = $region44
        $region43: #{tpu_custom_call.1} parent=39 // pred_region
          %s298 = sand.u32 %s34, 1
          %s299 = scalar_lea.sflag [#allocation3], %s298
          %s300 = sand.u32 %s34, 1
          %s301 = smul.addr %s300, 4
          %s302 = scalar_lea.vmem [#allocation2], %s301
          %s304 = ssub.s32 64, 64
          %305 = vsyncadd %s299, %s304
          %s306 = smul.addr %s24, 64
          %s307 = scalar_lea.hbm %s0, %s306
          %s309 = sshll.u32 %s302, 4
          %s310 = int_to_ptr.vmem [resolvable:$true] %s309
          %312 = dma.hbm_to_vmem [thread:$0]  %s307, 64, %s310, %s299
        $region44: #{tpu_custom_call.1} parent=39 // pred_fallthru
          _
        // Predicated region
        $region45: #{tpu_custom_call.1} parent=39 // pred_check
          %p313 = pneg %p70
        $region46: #{tpu_custom_call.1} parent=39 // pred_check_branch
          %315 = sbr.rel (%p313) target = $region48
        $region47: #{tpu_custom_call.1} parent=39 // pred_region
          %s316 = sand.u32 %s24, 1
          %s317 = scalar_lea.sflag [#allocation6], %s316
          %s318 = sand.u32 %s60, 1
          %s319 = scalar_lea.vmem [#allocation5], %s318
          %s321 = ssub.s32 16, 16
          %322 = vsyncadd %s317, %s321
          %s323 = smul.addr %s24, 16
          %s324 = scalar_lea.hbm %s1, %s323
          %s326 = sshll.u32 %s319, 4
          %s327 = int_to_ptr.vmem [resolvable:$true] %s326
          %329 = dma.hbm_to_vmem [thread:$0]  %s324, 16, %s327, %s317
        $region48: #{tpu_custom_call.1} parent=39 // pred_fallthru
          _
      $region40: #{tpu_custom_call.1} parent=5 // pred_fallthru
        _
      %p330 = scmp.le.s32.totalorder 1, %s24
      %p331 = scmp.lt.s32.totalorder %s24, 3
      %p332 = pnand %p330, %p331
      %p333 = pneg %p332
      // Predicated region
      $region49: #{tpu_custom_call.1} parent=5 // pred_check
        _
      $region50: #{tpu_custom_call.1} parent=5 // pred_check_branch
        %335 = sbr.rel (%p332) target = $region52
      $region51: #{tpu_custom_call.1} parent=5 // pred_region
        %s336 = ssub.s32 %s24, 1
        %s337 = sand.u32 %s37, 1
        %s338 = scalar_lea.sflag [#allocation3], %s337
        %s339 = sand.u32 %s37, 1
        %s340 = smul.addr %s339, 4
        %s341 = scalar_lea.vmem [#allocation2], %s340
        // Predicated region
        $region53: #{tpu_custom_call.1} parent=51 // pred_check
          %p342 = pneg %p50
        $region54: #{tpu_custom_call.1} parent=51 // pred_check_branch
          %344 = sbr.rel (%p342) target = $region56
        $region55: #{tpu_custom_call.1} parent=51 // pred_region
          %345 = dma.done %s338, 64
        $region56: #{tpu_custom_call.1} parent=51 // pred_fallthru
          _
        %s346 = sand.u32 %s29, 1
        %s347 = scalar_lea.sflag [#allocation6], %s346
        %s348 = sand.u32 %s63, 1
        %s349 = scalar_lea.vmem [#allocation5], %s348
        // Predicated region
        $region57: #{tpu_custom_call.1} parent=51 // pred_check
          %p350 = pneg %p76
        $region58: #{tpu_custom_call.1} parent=51 // pred_check_branch
          %352 = sbr.rel (%p350) target = $region60
        $region59: #{tpu_custom_call.1} parent=51 // pred_region
          %353 = dma.done %s347, 16
        $region60: #{tpu_custom_call.1} parent=51 // pred_fallthru
          _
        // Predicated region
        $region61: #{tpu_custom_call.1} parent=51 // pred_check
          %p354 = pneg %p97
        $region62: #{tpu_custom_call.1} parent=51 // pred_check_branch
          %356 = sbr.rel (%p354) target = $region64
        $region63: #{tpu_custom_call.1} parent=51 // pred_region
          %357 = dma.done [#allocation6], 256
        $region64: #{tpu_custom_call.1} parent=51 // pred_fallthru
          _
        // Predicated region
        $region65: #{tpu_custom_call.1} parent=51 // pred_check
          %p358 = pneg %p139
        $region66: #{tpu_custom_call.1} parent=51 // pred_check_branch
          %360 = sbr.rel (%p358) target = $region68
        $region67: #{tpu_custom_call.1} parent=51 // pred_region
          %361 = dma.done [#allocation9], 256
        $region68: #{tpu_custom_call.1} parent=51 // pred_fallthru
          _
        // Predicated region
        $region69: #{tpu_custom_call.1} parent=51 // pred_check
          %p362 = pneg %p181
        $region70: #{tpu_custom_call.1} parent=51 // pred_check_branch
          %364 = sbr.rel (%p362) target = $region72
        $region71: #{tpu_custom_call.1} parent=51 // pred_region
          %365 = dma.done [#allocation9], 256
        $region72: #{tpu_custom_call.1} parent=51 // pred_fallthru
          _
        %s366 = sand.u32 %s37, 1
        %s367 = scalar_lea.sflag [#allocation3], %s366
        %s368 = sand.u32 %s37, 1
        %s369 = smul.addr %s368, 4
        %s370 = scalar_lea.vmem [#allocation2], %s369
        %p371 = pneg %p50
        %p372 = pneg %p47
        %s373 = sand.u32 %s29, 1
        %s374 = scalar_lea.sflag [#allocation6], %s373
        %s375 = sand.u32 %s63, 1
        %s376 = scalar_lea.vmem [#allocation5], %s375
        %p377 = pneg %p76
        %p378 = pneg %p73
        %p379 = pneg %p97
        %p380 = pneg %p94
        %p381 = pneg %p118
        %p382 = pneg %p115
        %p383 = pneg %p139
        %p384 = pneg %p136
        %p385 = pneg %p160
        %p386 = pneg %p157
        %p387 = pneg %p181
        %p388 = pneg %p178
        %p389 = pneg %p202
        %p390 = pneg %p199
        %p391 = pneg %p228
        %p392 = pneg %p225
        %s393 = sand.u32 %s215, 1
        %s394 = scalar_lea.sflag [#allocation4], %s393
        %s395 = sand.u32 %s215, 1
        %s396 = smul.addr %s395, 8
        %s397 = scalar_lea.vmem [#allocation11], %s396
        %v399 = vld [vmem:[%s341] sm:$0xf]
        %v400 = vld [vmem:[#allocation7] sm:$0xf]
        %v401 = vld [vmem:[#allocation7 + $0x4] sm:$0xf]
        %v402 = vld [vmem:[#allocation7 + $0x8] sm:$0xf]
        %v403 = vld [vmem:[#allocation7 + $0xc] sm:$0xf]
        %v404 = vld [vmem:[%s3] sm:$0x1]
        %v406 = vlaneseq
        %v407 = vshrl.u32 %v406, 7
        %v408 = vsub.s32 0, %v407
        %v409 = vrot.slane %v404, %v408
        %v415 = vunpack.c.l.b16 %v400
        %v416 = vunpack.c.l.b16 %v401
        %v417 = vunpack.c.l.b16 %v402
        %v418 = vunpack.c.l.b16 %v403
        %v419 = vpack.c.b16 %v416, %v415
        %v420 = vpack.c.b16 %v418, %v417
        %vm423 = vcmask 261120
        %v425 = vsel %vm423, %v399, 0
        %427 = vmatprep.subr.bf16.mxu0 0
        %428 = vmatpush1.bf16.msra.mxu0 0
        %429 = vmatprep.subr.bf16.mxu0 0
        %430 = vmatpush1.bf16.msra.mxu0 0
        %431 = vmatprep.subr.bf16.mxu0 0
        %432 = vmatpush1.bf16.msra.mxu0 0
        %433 = vmatprep.subr.bf16.mxu0 0
        %434 = vmatpush1.bf16.msra.mxu0 0
        %435 = vmatprep.subr.bf16.mxu0 0
        %436 = vmatpush1.bf16.msra.mxu0 0
        %437 = vmatprep.subr.bf16.mxu0 0
        %438 = vmatpush1.bf16.msra.mxu0 0
        %439 = vmatprep.subr.bf16.mxu0 0
        %440 = vmatpush1.bf16.msra.mxu0 %v420
        %441 = vmatprep.subr.bf16.mxu0 0
        %442 = vmatpush1.bf16.msra.mxu0 %v419
        %443 = vmatprep.subr.bf16.mxu0 0
        %444 = vmatpush2.bf16.msra.mxu0 0
        %445 = vmatprep.subr.bf16.mxu0 0
        %446 = vmatpush2.bf16.msra.mxu0 0
        %447 = vmatprep.subr.bf16.mxu0 0
        %448 = vmatpush2.bf16.msra.mxu0 0
        %449 = vmatprep.subr.bf16.mxu0 0
        %450 = vmatpush2.bf16.msra.mxu0 0
        %451 = vmatprep.subr.bf16.mxu0 0
        %452 = vmatpush2.bf16.msra.mxu0 0
        %453 = vmatprep.subr.bf16.mxu0 0
        %454 = vmatpush2.bf16.msra.mxu0 0
        %455 = vmatprep.subr.bf16.mxu0 0
        %456 = vmatpush2.bf16.msra.mxu0 0
        %457 = vmatprep.subr.bf16.mxu0 0
        %458 = vmatpush2.bf16.msra.mxu0 0
        %459 = vmatprep.mubr.bf16.mxu0 0
        %460 = vmatmul.mubr.bf16.gmra.mxu0 %v425
        %v461 = vpop.f32.mrf.mxu0
        %v462 = vadd.f32 %v409, %v461
        %v463 = vpop.f32.mrf.mxu0
        %v464 = vpop.f32.mrf.mxu0
        %v465 = vpop.f32.mrf.mxu0
        %466 = vdwg.mxu0
        %v467 = vld [vmem:[#allocation8] sm:$0xf]
        %v468 = vld [vmem:[#allocation8 + $0x4] sm:$0xf]
        %v469 = vld [vmem:[#allocation8 + $0x8] sm:$0xf]
        %v470 = vld [vmem:[#allocation8 + $0xc] sm:$0xf]
        %v471 = vld [vmem:[%s5] sm:$0x1]
        %v473 = vlaneseq
        %v474 = vshrl.u32 %v473, 7
        %v475 = vsub.s32 0, %v474
        %v476 = vrot.slane %v471, %v475
        %v482 = vunpack.c.l.b16 %v467
        %v483 = vunpack.c.l.b16 %v468
        %v484 = vunpack.c.l.b16 %v469
        %v485 = vunpack.c.l.b16 %v470
        %v486 = vpack.c.b16 %v483, %v482
        %v487 = vpack.c.b16 %v485, %v484
        %490 = vmatprep.subr.bf16.mxu0 0
        %491 = vmatpush1.bf16.msra.mxu0 0
        %492 = vmatprep.subr.bf16.mxu0 0
        %493 = vmatpush1.bf16.msra.mxu0 0
        %494 = vmatprep.subr.bf16.mxu0 0
        %495 = vmatpush1.bf16.msra.mxu0 0
        %496 = vmatprep.subr.bf16.mxu0 0
        %497 = vmatpush1.bf16.msra.mxu0 0
        %498 = vmatprep.subr.bf16.mxu0 0
        %499 = vmatpush1.bf16.msra.mxu0 0
        %500 = vmatprep.subr.bf16.mxu0 0
        %501 = vmatpush1.bf16.msra.mxu0 0
        %502 = vmatprep.subr.bf16.mxu0 0
        %503 = vmatpush1.bf16.msra.mxu0 %v487
        %504 = vmatprep.subr.bf16.mxu0 0
        %505 = vmatpush1.bf16.msra.mxu0 %v486
        %506 = vmatprep.subr.bf16.mxu0 0
        %507 = vmatpush2.bf16.msra.mxu0 0
        %508 = vmatprep.subr.bf16.mxu0 0
        %509 = vmatpush2.bf16.msra.mxu0 0
        %510 = vmatprep.subr.bf16.mxu0 0
        %511 = vmatpush2.bf16.msra.mxu0 0
        %512 = vmatprep.subr.bf16.mxu0 0
        %513 = vmatpush2.bf16.msra.mxu0 0
        %514 = vmatprep.subr.bf16.mxu0 0
        %515 = vmatpush2.bf16.msra.mxu0 0
        %516 = vmatprep.subr.bf16.mxu0 0
        %517 = vmatpush2.bf16.msra.mxu0 0
        %518 = vmatprep.subr.bf16.mxu0 0
        %519 = vmatpush2.bf16.msra.mxu0 0
        %520 = vmatprep.subr.bf16.mxu0 0
        %521 = vmatpush2.bf16.msra.mxu0 0
        %522 = vmatprep.mubr.bf16.mxu0 0
        %523 = vmatmul.mubr.bf16.gmra.mxu0 %v425
        %v524 = vpop.f32.mrf.mxu0
        %v525 = vadd.f32 %v476, %v524
        %v526 = vpop.f32.mrf.mxu0
        %v527 = vpop.f32.mrf.mxu0
        %v528 = vpop.f32.mrf.mxu0
        %529 = vdwg.mxu0
        %v530 = vld [vmem:[#allocation10] sm:$0xf]
        %v531 = vld [vmem:[#allocation10 + $0x4] sm:$0xf]
        %v532 = vld [vmem:[#allocation10 + $0x8] sm:$0xf]
        %v533 = vld [vmem:[#allocation10 + $0xc] sm:$0xf]
        %v534 = vld [vmem:[%s7] sm:$0x1]
        %v536 = vlaneseq
        %v537 = vshrl.u32 %v536, 7
        %v538 = vsub.s32 0, %v537
        %v539 = vrot.slane %v534, %v538
        %v545 = vunpack.c.l.b16 %v530
        %v546 = vunpack.c.l.b16 %v531
        %v547 = vunpack.c.l.b16 %v532
        %v548 = vunpack.c.l.b16 %v533
        %v549 = vpack.c.b16 %v546, %v545
        %v550 = vpack.c.b16 %v548, %v547
        %553 = vmatprep.subr.bf16.mxu0 0
        %554 = vmatpush1.bf16.msra.mxu0 0
        %555 = vmatprep.subr.bf16.mxu0 0
        %556 = vmatpush1.bf16.msra.mxu0 0
        %557 = vmatprep.subr.bf16.mxu0 0
        %558 = vmatpush1.bf16.msra.mxu0 0
        %559 = vmatprep.subr.bf16.mxu0 0
        %560 = vmatpush1.bf16.msra.mxu0 0
        %561 = vmatprep.subr.bf16.mxu0 0
        %562 = vmatpush1.bf16.msra.mxu0 0
        %563 = vmatprep.subr.bf16.mxu0 0
        %564 = vmatpush1.bf16.msra.mxu0 0
        %565 = vmatprep.subr.bf16.mxu0 0
        %566 = vmatpush1.bf16.msra.mxu0 %v550
        %567 = vmatprep.subr.bf16.mxu0 0
        %568 = vmatpush1.bf16.msra.mxu0 %v549
        %569 = vmatprep.subr.bf16.mxu0 0
        %570 = vmatpush2.bf16.msra.mxu0 0
        %571 = vmatprep.subr.bf16.mxu0 0
        %572 = vmatpush2.bf16.msra.mxu0 0
        %573 = vmatprep.subr.bf16.mxu0 0
        %574 = vmatpush2.bf16.msra.mxu0 0
        %575 = vmatprep.subr.bf16.mxu0 0
        %576 = vmatpush2.bf16.msra.mxu0 0
        %577 = vmatprep.subr.bf16.mxu0 0
        %578 = vmatpush2.bf16.msra.mxu0 0
        %579 = vmatprep.subr.bf16.mxu0 0
        %580 = vmatpush2.bf16.msra.mxu0 0
        %581 = vmatprep.subr.bf16.mxu0 0
        %582 = vmatpush2.bf16.msra.mxu0 0
        %583 = vmatprep.subr.bf16.mxu0 0
        %584 = vmatpush2.bf16.msra.mxu0 0
        %585 = vmatprep.mubr.bf16.mxu0 0
        %586 = vmatmul.mubr.bf16.gmra.mxu0 %v425
        %v587 = vpop.f32.mrf.mxu0
        %v588 = vadd.f32 %v539, %v587
        %v589 = vpop.f32.mrf.mxu0
        %v590 = vpop.f32.mrf.mxu0
        %v591 = vpop.f32.mrf.mxu0
        %592 = vdwg.mxu0
        %v593 = vld [vmem:[%s349] sm:$0x1]
        %vm594 = vcmask 64512
        %v596 = vsel %vm594, %v462, 0
        %v599 = vsel %vm594, %v525, 0
        %601 = vmatprep.subr.mxu0 0.0
        %602 = vmatpush1.xpose.msra.mxu0 0.0
        %603 = vmatprep.subr.mxu0 0.0
        %604 = vmatpush1.xpose.msra.mxu0 0.0
        %605 = vmatprep.subr.mxu0 0.0
        %606 = vmatpush1.xpose.msra.mxu0 0.0
        %607 = vmatprep.subr.mxu0 0.0
        %608 = vmatpush1.xpose.msra.mxu0 0.0
        %609 = vmatprep.subr.mxu0 0.0
        %610 = vmatpush1.xpose.msra.mxu0 0.0
        %611 = vmatprep.subr.mxu0 0.0
        %612 = vmatpush1.xpose.msra.mxu0 0.0
        %613 = vmatprep.subr.mxu0 0.0
        %614 = vmatpush1.xpose.msra.mxu0 0.0
        %615 = vmatprep.subr.mxu0 0.0
        %616 = vmatpush1.xpose.msra.mxu0 0.0
        %617 = vmatprep.subr.mxu0 0.0
        %618 = vmatpush1.xpose.msra.mxu0 0.0
        %619 = vmatprep.subr.mxu0 0.0
        %620 = vmatpush1.xpose.msra.mxu0 0.0
        %621 = vmatprep.subr.mxu0 0.0
        %622 = vmatpush1.xpose.msra.mxu0 0.0
        %623 = vmatprep.subr.mxu0 0.0
        %624 = vmatpush1.xpose.msra.mxu0 0.0
        %625 = vmatprep.subr.mxu0 0.0
        %626 = vmatpush1.xpose.msra.mxu0 0.0
        %627 = vmatprep.subr.mxu0 0.0
        %628 = vmatpush1.xpose.msra.mxu0 0.0
        %629 = vmatprep.subr.mxu0 0.0
        %630 = vmatpush1.xpose.msra.mxu0 0.0
        %631 = vmatprep.subr.mxu0 0.0
        %632 = vmatpush1.xpose.msra.mxu0 %v599
        %633 = vmatprep.subr.mxu0 0.0
        %634 = vmatpush2.xpose.msra.mxu0 0.0
        %635 = vmatprep.subr.mxu0 0.0
        %636 = vmatpush2.xpose.msra.mxu0 0.0
        %637 = vmatprep.subr.mxu0 0.0
        %638 = vmatpush2.xpose.msra.mxu0 0.0
        %639 = vmatprep.subr.mxu0 0.0
        %640 = vmatpush2.xpose.msra.mxu0 0.0
        %641 = vmatprep.subr.mxu0 0.0
        %642 = vmatpush2.xpose.msra.mxu0 0.0
        %643 = vmatprep.subr.mxu0 0.0
        %644 = vmatpush2.xpose.msra.mxu0 0.0
        %645 = vmatprep.subr.mxu0 0.0
        %646 = vmatpush2.xpose.msra.mxu0 0.0
        %647 = vmatprep.subr.mxu0 0.0
        %648 = vmatpush2.xpose.msra.mxu0 0.0
        %649 = vmatprep.subr.mxu0 0.0
        %650 = vmatpush2.xpose.msra.mxu0 0.0
        %651 = vmatprep.subr.mxu0 0.0
        %652 = vmatpush2.xpose.msra.mxu0 0.0
        %653 = vmatprep.subr.mxu0 0.0
        %654 = vmatpush2.xpose.msra.mxu0 0.0
        %655 = vmatprep.subr.mxu0 0.0
        %656 = vmatpush2.xpose.msra.mxu0 0.0
        %657 = vmatprep.subr.mxu0 0.0
        %658 = vmatpush2.xpose.msra.mxu0 0.0
        %659 = vmatprep.subr.mxu0 0.0
        %660 = vmatpush2.xpose.msra.mxu0 0.0
        %661 = vmatprep.subr.mxu0 0.0
        %662 = vmatpush2.xpose.msra.mxu0 0.0
        %663 = vmatprep.subr.mxu0 0.0
        %664 = vmatpush2.xpose.msra.mxu0 0.0
        %665 = vmatprep.mubr.f32.mxu0 0.0
        %666 = vmatmul.mubr.f32.gmra.mxu0 %v596
        %v667 = vpop.f32.mrf.mxu0
        %v668 = vadd.f32 0.0, %v667
        %v669 = vpop.f32.mrf.mxu0
        %670 = vdwg.mxu0
        %v671 = vmul.f32 %v668, 0.35355338
        %v673 = vlaneseq
        %v674 = vshrl.u32 %v673, 7
        %v675 = vsub.s32 0, %v674
        %v676 = vrot.slane %v593, %v675
        %v678 = vadd.f32 %v671, %v676
        %v679 = vsel %vm594, %v678, -inf
        %680 = vmax.xlane.f32.xlu0 %v679
        %v681 = vpop.xlane.xlu0 %680
        %v682 = vsub.f32 %v678, %v681
        %v683 = vmul.f32 %v682, 1.442695
        %v684 = vpow.pop %v683
        %v685 = vsel %vm594, %v684, 0.0
        %686 = vadd.xlane.f32.xlu0 %v685
        %v687 = vpop.xlane.xlu0 %686
        %v688 = vrcp.pop %v687
        %v689 = vmul.f32 %v684, %v688
        %v691 = vsel %vm594, %v689, 0
        %693 = vmatprep.subr.mxu0 0.0
        %694 = vmatpush1.msra.mxu0 0.0
        %695 = vmatprep.subr.mxu0 0.0
        %696 = vmatpush1.msra.mxu0 0.0
        %697 = vmatprep.subr.mxu0 0.0
        %698 = vmatpush1.msra.mxu0 0.0
        %699 = vmatprep.subr.mxu0 0.0
        %700 = vmatpush1.msra.mxu0 0.0
        %701 = vmatprep.subr.mxu0 0.0
        %702 = vmatpush1.msra.mxu0 0.0
        %703 = vmatprep.subr.mxu0 0.0
        %704 = vmatpush1.msra.mxu0 0.0
        %705 = vmatprep.subr.mxu0 0.0
        %706 = vmatpush1.msra.mxu0 0.0
        %707 = vmatprep.subr.mxu0 0.0
        %708 = vmatpush1.msra.mxu0 0.0
        %709 = vmatprep.subr.mxu0 0.0
        %710 = vmatpush1.msra.mxu0 0.0
        %711 = vmatprep.subr.mxu0 0.0
        %712 = vmatpush1.msra.mxu0 0.0
        %713 = vmatprep.subr.mxu0 0.0
        %714 = vmatpush1.msra.mxu0 0.0
        %715 = vmatprep.subr.mxu0 0.0
        %716 = vmatpush1.msra.mxu0 0.0
        %717 = vmatprep.subr.mxu0 0.0
        %718 = vmatpush1.msra.mxu0 0.0
        %719 = vmatprep.subr.mxu0 0.0
        %720 = vmatpush1.msra.mxu0 0.0
        %721 = vmatprep.subr.mxu0 0.0
        %722 = vmatpush1.msra.mxu0 0.0
        %723 = vmatprep.subr.mxu0 0.0
        %724 = vmatpush1.msra.mxu0 %v588
        %725 = vmatprep.subr.mxu0 0.0
        %726 = vmatpush2.msra.mxu0 0.0
        %727 = vmatprep.subr.mxu0 0.0
        %728 = vmatpush2.msra.mxu0 0.0
        %729 = vmatprep.subr.mxu0 0.0
        %730 = vmatpush2.msra.mxu0 0.0
        %731 = vmatprep.subr.mxu0 0.0
        %732 = vmatpush2.msra.mxu0 0.0
        %733 = vmatprep.subr.mxu0 0.0
        %734 = vmatpush2.msra.mxu0 0.0
        %735 = vmatprep.subr.mxu0 0.0
        %736 = vmatpush2.msra.mxu0 0.0
        %737 = vmatprep.subr.mxu0 0.0
        %738 = vmatpush2.msra.mxu0 0.0
        %739 = vmatprep.subr.mxu0 0.0
        %740 = vmatpush2.msra.mxu0 0.0
        %741 = vmatprep.subr.mxu0 0.0
        %742 = vmatpush2.msra.mxu0 0.0
        %743 = vmatprep.subr.mxu0 0.0
        %744 = vmatpush2.msra.mxu0 0.0
        %745 = vmatprep.subr.mxu0 0.0
        %746 = vmatpush2.msra.mxu0 0.0
        %747 = vmatprep.subr.mxu0 0.0
        %748 = vmatpush2.msra.mxu0 0.0
        %749 = vmatprep.subr.mxu0 0.0
        %750 = vmatpush2.msra.mxu0 0.0
        %751 = vmatprep.subr.mxu0 0.0
        %752 = vmatpush2.msra.mxu0 0.0
        %753 = vmatprep.subr.mxu0 0.0
        %754 = vmatpush2.msra.mxu0 0.0
        %755 = vmatprep.subr.mxu0 0.0
        %756 = vmatpush2.msra.mxu0 0.0
        %757 = vmatprep.mubr.f32.mxu0 0.0
        %758 = vmatmul.mubr.f32.gmra.mxu0 %v691
        %v759 = vpop.f32.mrf.mxu0
        %v760 = vadd.f32 0.0, %v759
        %v761 = vpop.f32.mrf.mxu0
        %762 = vdwg.mxu0
        %763 = vrot.lane.b32.xlu0 %v462, 120
        %v764 = vpop.permute.xlu0 %763
        %765 = vrot.lane.b32.xlu0 %v525, 120
        %v766 = vpop.permute.xlu0 %765
        %v767 = vsel %vm594, %v764, 0
        %v769 = vsel %vm594, %v766, 0
        %771 = vmatprep.subr.mxu0 0.0
        %772 = vmatpush1.xpose.msra.mxu0 0.0
        %773 = vmatprep.subr.mxu0 0.0
        %774 = vmatpush1.xpose.msra.mxu0 0.0
        %775 = vmatprep.subr.mxu0 0.0
        %776 = vmatpush1.xpose.msra.mxu0 0.0
        %777 = vmatprep.subr.mxu0 0.0
        %778 = vmatpush1.xpose.msra.mxu0 0.0
        %779 = vmatprep.subr.mxu0 0.0
        %780 = vmatpush1.xpose.msra.mxu0 0.0
        %781 = vmatprep.subr.mxu0 0.0
        %782 = vmatpush1.xpose.msra.mxu0 0.0
        %783 = vmatprep.subr.mxu0 0.0
        %784 = vmatpush1.xpose.msra.mxu0 0.0
        %785 = vmatprep.subr.mxu0 0.0
        %786 = vmatpush1.xpose.msra.mxu0 0.0
        %787 = vmatprep.subr.mxu0 0.0
        %788 = vmatpush1.xpose.msra.mxu0 0.0
        %789 = vmatprep.subr.mxu0 0.0
        %790 = vmatpush1.xpose.msra.mxu0 0.0
        %791 = vmatprep.subr.mxu0 0.0
        %792 = vmatpush1.xpose.msra.mxu0 0.0
        %793 = vmatprep.subr.mxu0 0.0
        %794 = vmatpush1.xpose.msra.mxu0 0.0
        %795 = vmatprep.subr.mxu0 0.0
        %796 = vmatpush1.xpose.msra.mxu0 0.0
        %797 = vmatprep.subr.mxu0 0.0
        %798 = vmatpush1.xpose.msra.mxu0 0.0
        %799 = vmatprep.subr.mxu0 0.0
        %800 = vmatpush1.xpose.msra.mxu0 0.0
        %801 = vmatprep.subr.mxu0 0.0
        %802 = vmatpush1.xpose.msra.mxu0 %v769
        %803 = vmatprep.subr.mxu0 0.0
        %804 = vmatpush2.xpose.msra.mxu0 0.0
        %805 = vmatprep.subr.mxu0 0.0
        %806 = vmatpush2.xpose.msra.mxu0 0.0
        %807 = vmatprep.subr.mxu0 0.0
        %808 = vmatpush2.xpose.msra.mxu0 0.0
        %809 = vmatprep.subr.mxu0 0.0
        %810 = vmatpush2.xpose.msra.mxu0 0.0
        %811 = vmatprep.subr.mxu0 0.0
        %812 = vmatpush2.xpose.msra.mxu0 0.0
        %813 = vmatprep.subr.mxu0 0.0
        %814 = vmatpush2.xpose.msra.mxu0 0.0
        %815 = vmatprep.subr.mxu0 0.0
        %816 = vmatpush2.xpose.msra.mxu0 0.0
        %817 = vmatprep.subr.mxu0 0.0
        %818 = vmatpush2.xpose.msra.mxu0 0.0
        %819 = vmatprep.subr.mxu0 0.0
        %820 = vmatpush2.xpose.msra.mxu0 0.0
        %821 = vmatprep.subr.mxu0 0.0
        %822 = vmatpush2.xpose.msra.mxu0 0.0
        %823 = vmatprep.subr.mxu0 0.0
        %824 = vmatpush2.xpose.msra.mxu0 0.0
        %825 = vmatprep.subr.mxu0 0.0
        %826 = vmatpush2.xpose.msra.mxu0 0.0
        %827 = vmatprep.subr.mxu0 0.0
        %828 = vmatpush2.xpose.msra.mxu0 0.0
        %829 = vmatprep.subr.mxu0 0.0
        %830 = vmatpush2.xpose.msra.mxu0 0.0
        %831 = vmatprep.subr.mxu0 0.0
        %832 = vmatpush2.xpose.msra.mxu0 0.0
        %833 = vmatprep.subr.mxu0 0.0
        %834 = vmatpush2.xpose.msra.mxu0 0.0
        %835 = vmatprep.mubr.f32.mxu0 0.0
        %836 = vmatmul.mubr.f32.gmra.mxu0 %v767
        %v837 = vpop.f32.mrf.mxu0
        %v838 = vadd.f32 0.0, %v837
        %v839 = vpop.f32.mrf.mxu0
        %840 = vdwg.mxu0
        %v841 = vmul.f32 %v838, 0.35355338
        %v842 = vadd.f32 %v841, %v676
        %v843 = vsel %vm594, %v842, -inf
        %844 = vmax.xlane.f32.xlu0 %v843
        %v845 = vpop.xlane.xlu0 %844
        %v846 = vsub.f32 %v842, %v845
        %v847 = vmul.f32 %v846, 1.442695
        %v848 = vpow.pop %v847
        %v849 = vsel %vm594, %v848, 0.0
        %850 = vadd.xlane.f32.xlu0 %v849
        %v851 = vpop.xlane.xlu0 %850
        %v852 = vrcp.pop %v851
        %v853 = vmul.f32 %v848, %v852
        %855 = vrot.lane.b32.xlu0 %v588, 120
        %v856 = vpop.permute.xlu0 %855
        %v859 = vsel %vm594, %v853, 0
        %861 = vmatprep.subr.mxu0 0.0
        %862 = vmatpush1.msra.mxu0 0.0
        %863 = vmatprep.subr.mxu0 0.0
        %864 = vmatpush1.msra.mxu0 0.0
        %865 = vmatprep.subr.mxu0 0.0
        %866 = vmatpush1.msra.mxu0 0.0
        %867 = vmatprep.subr.mxu0 0.0
        %868 = vmatpush1.msra.mxu0 0.0
        %869 = vmatprep.subr.mxu0 0.0
        %870 = vmatpush1.msra.mxu0 0.0
        %871 = vmatprep.subr.mxu0 0.0
        %872 = vmatpush1.msra.mxu0 0.0
        %873 = vmatprep.subr.mxu0 0.0
        %874 = vmatpush1.msra.mxu0 0.0
        %875 = vmatprep.subr.mxu0 0.0
        %876 = vmatpush1.msra.mxu0 0.0
        %877 = vmatprep.subr.mxu0 0.0
        %878 = vmatpush1.msra.mxu0 0.0
        %879 = vmatprep.subr.mxu0 0.0
        %880 = vmatpush1.msra.mxu0 0.0
        %881 = vmatprep.subr.mxu0 0.0
        %882 = vmatpush1.msra.mxu0 0.0
        %883 = vmatprep.subr.mxu0 0.0
        %884 = vmatpush1.msra.mxu0 0.0
        %885 = vmatprep.subr.mxu0 0.0
        %886 = vmatpush1.msra.mxu0 0.0
        %887 = vmatprep.subr.mxu0 0.0
        %888 = vmatpush1.msra.mxu0 0.0
        %889 = vmatprep.subr.mxu0 0.0
        %890 = vmatpush1.msra.mxu0 0.0
        %891 = vmatprep.subr.mxu0 0.0
        %892 = vmatpush1.msra.mxu0 %v856
        %893 = vmatprep.subr.mxu0 0.0
        %894 = vmatpush2.msra.mxu0 0.0
        %895 = vmatprep.subr.mxu0 0.0
        %896 = vmatpush2.msra.mxu0 0.0
        %897 = vmatprep.subr.mxu0 0.0
        %898 = vmatpush2.msra.mxu0 0.0
        %899 = vmatprep.subr.mxu0 0.0
        %900 = vmatpush2.msra.mxu0 0.0
        %901 = vmatprep.subr.mxu0 0.0
        %902 = vmatpush2.msra.mxu0 0.0
        %903 = vmatprep.subr.mxu0 0.0
        %904 = vmatpush2.msra.mxu0 0.0
        %905 = vmatprep.subr.mxu0 0.0
        %906 = vmatpush2.msra.mxu0 0.0
        %907 = vmatprep.subr.mxu0 0.0
        %908 = vmatpush2.msra.mxu0 0.0
        %909 = vmatprep.subr.mxu0 0.0
        %910 = vmatpush2.msra.mxu0 0.0
        %911 = vmatprep.subr.mxu0 0.0
        %912 = vmatpush2.msra.mxu0 0.0
        %913 = vmatprep.subr.mxu0 0.0
        %914 = vmatpush2.msra.mxu0 0.0
        %915 = vmatprep.subr.mxu0 0.0
        %916 = vmatpush2.msra.mxu0 0.0
        %917 = vmatprep.subr.mxu0 0.0
        %918 = vmatpush2.msra.mxu0 0.0
        %919 = vmatprep.subr.mxu0 0.0
        %920 = vmatpush2.msra.mxu0 0.0
        %921 = vmatprep.subr.mxu0 0.0
        %922 = vmatpush2.msra.mxu0 0.0
        %923 = vmatprep.subr.mxu0 0.0
        %924 = vmatpush2.msra.mxu0 0.0
        %925 = vmatprep.mubr.f32.mxu0 0.0
        %926 = vmatmul.mubr.f32.gmra.mxu0 %v859
        %v927 = vpop.f32.mrf.mxu0
        %v928 = vadd.f32 0.0, %v927
        %v929 = vpop.f32.mrf.mxu0
        %930 = vdwg.mxu0
        %931 = vrot.lane.b32.xlu0 %v462, 112
        %v932 = vpop.permute.xlu0 %931
        %933 = vrot.lane.b32.xlu0 %v525, 112
        %v934 = vpop.permute.xlu0 %933
        %v935 = vsel %vm594, %v932, 0
        %v937 = vsel %vm594, %v934, 0
        %939 = vmatprep.subr.mxu0 0.0
        %940 = vmatpush1.xpose.msra.mxu0 0.0
        %941 = vmatprep.subr.mxu0 0.0
        %942 = vmatpush1.xpose.msra.mxu0 0.0
        %943 = vmatprep.subr.mxu0 0.0
        %944 = vmatpush1.xpose.msra.mxu0 0.0
        %945 = vmatprep.subr.mxu0 0.0
        %946 = vmatpush1.xpose.msra.mxu0 0.0
        %947 = vmatprep.subr.mxu0 0.0
        %948 = vmatpush1.xpose.msra.mxu0 0.0
        %949 = vmatprep.subr.mxu0 0.0
        %950 = vmatpush1.xpose.msra.mxu0 0.0
        %951 = vmatprep.subr.mxu0 0.0
        %952 = vmatpush1.xpose.msra.mxu0 0.0
        %953 = vmatprep.subr.mxu0 0.0
        %954 = vmatpush1.xpose.msra.mxu0 0.0
        %955 = vmatprep.subr.mxu0 0.0
        %956 = vmatpush1.xpose.msra.mxu0 0.0
        %957 = vmatprep.subr.mxu0 0.0
        %958 = vmatpush1.xpose.msra.mxu0 0.0
        %959 = vmatprep.subr.mxu0 0.0
        %960 = vmatpush1.xpose.msra.mxu0 0.0
        %961 = vmatprep.subr.mxu0 0.0
        %962 = vmatpush1.xpose.msra.mxu0 0.0
        %963 = vmatprep.subr.mxu0 0.0
        %964 = vmatpush1.xpose.msra.mxu0 0.0
        %965 = vmatprep.subr.mxu0 0.0
        %966 = vmatpush1.xpose.msra.mxu0 0.0
        %967 = vmatprep.subr.mxu0 0.0
        %968 = vmatpush1.xpose.msra.mxu0 0.0
        %969 = vmatprep.subr.mxu0 0.0
        %970 = vmatpush1.xpose.msra.mxu0 %v937
        %971 = vmatprep.subr.mxu0 0.0
        %972 = vmatpush2.xpose.msra.mxu0 0.0
        %973 = vmatprep.subr.mxu0 0.0
        %974 = vmatpush2.xpose.msra.mxu0 0.0
        %975 = vmatprep.subr.mxu0 0.0
        %976 = vmatpush2.xpose.msra.mxu0 0.0
        %977 = vmatprep.subr.mxu0 0.0
        %978 = vmatpush2.xpose.msra.mxu0 0.0
        %979 = vmatprep.subr.mxu0 0.0
        %980 = vmatpush2.xpose.msra.mxu0 0.0
        %981 = vmatprep.subr.mxu0 0.0
        %982 = vmatpush2.xpose.msra.mxu0 0.0
        %983 = vmatprep.subr.mxu0 0.0
        %984 = vmatpush2.xpose.msra.mxu0 0.0
        %985 = vmatprep.subr.mxu0 0.0
        %986 = vmatpush2.xpose.msra.mxu0 0.0
        %987 = vmatprep.subr.mxu0 0.0
        %988 = vmatpush2.xpose.msra.mxu0 0.0
        %989 = vmatprep.subr.mxu0 0.0
        %990 = vmatpush2.xpose.msra.mxu0 0.0
        %991 = vmatprep.subr.mxu0 0.0
        %992 = vmatpush2.xpose.msra.mxu0 0.0
        %993 = vmatprep.subr.mxu0 0.0
        %994 = vmatpush2.xpose.msra.mxu0 0.0
        %995 = vmatprep.subr.mxu0 0.0
        %996 = vmatpush2.xpose.msra.mxu0 0.0
        %997 = vmatprep.subr.mxu0 0.0
        %998 = vmatpush2.xpose.msra.mxu0 0.0
        %999 = vmatprep.subr.mxu0 0.0
        %1000 = vmatpush2.xpose.msra.mxu0 0.0
        %1001 = vmatprep.subr.mxu0 0.0
        %1002 = vmatpush2.xpose.msra.mxu0 0.0
        %1003 = vmatprep.mubr.f32.mxu0 0.0
        %1004 = vmatmul.mubr.f32.gmra.mxu0 %v935
        %v1005 = vpop.f32.mrf.mxu0
        %v1006 = vadd.f32 0.0, %v1005
        %v1007 = vpop.f32.mrf.mxu0
        %1008 = vdwg.mxu0
        %v1009 = vmul.f32 %v1006, 0.35355338
        %v1010 = vadd.f32 %v1009, %v676
        %v1011 = vsel %vm594, %v1010, -inf
        %1012 = vmax.xlane.f32.xlu0 %v1011
        %v1013 = vpop.xlane.xlu0 %1012
        %v1014 = vsub.f32 %v1010, %v1013
        %v1015 = vmul.f32 %v1014, 1.442695
        %v1016 = vpow.pop %v1015
        %v1017 = vsel %vm594, %v1016, 0.0
        %1018 = vadd.xlane.f32.xlu0 %v1017
        %v1019 = vpop.xlane.xlu0 %1018
        %v1020 = vrcp.pop %v1019
        %v1021 = vmul.f32 %v1016, %v1020
        %1022 = vrot.lane.b32.xlu0 %v588, 112
        %v1023 = vpop.permute.xlu0 %1022
        %v1026 = vsel %vm594, %v1021, 0
        %1028 = vmatprep.subr.mxu0 0.0
        %1029 = vmatpush1.msra.mxu0 0.0
        %1030 = vmatprep.subr.mxu0 0.0
        %1031 = vmatpush1.msra.mxu0 0.0
        %1032 = vmatprep.subr.mxu0 0.0
        %1033 = vmatpush1.msra.mxu0 0.0
        %1034 = vmatprep.subr.mxu0 0.0
        %1035 = vmatpush1.msra.mxu0 0.0
        %1036 = vmatprep.subr.mxu0 0.0
        %1037 = vmatpush1.msra.mxu0 0.0
        %1038 = vmatprep.subr.mxu0 0.0
        %1039 = vmatpush1.msra.mxu0 0.0
        %1040 = vmatprep.subr.mxu0 0.0
        %1041 = vmatpush1.msra.mxu0 0.0
        %1042 = vmatprep.subr.mxu0 0.0
        %1043 = vmatpush1.msra.mxu0 0.0
        %1044 = vmatprep.subr.mxu0 0.0
        %1045 = vmatpush1.msra.mxu0 0.0
        %1046 = vmatprep.subr.mxu0 0.0
        %1047 = vmatpush1.msra.mxu0 0.0
        %1048 = vmatprep.subr.mxu0 0.0
        %1049 = vmatpush1.msra.mxu0 0.0
        %1050 = vmatprep.subr.mxu0 0.0
        %1051 = vmatpush1.msra.mxu0 0.0
        %1052 = vmatprep.subr.mxu0 0.0
        %1053 = vmatpush1.msra.mxu0 0.0
        %1054 = vmatprep.subr.mxu0 0.0
        %1055 = vmatpush1.msra.mxu0 0.0
        %1056 = vmatprep.subr.mxu0 0.0
        %1057 = vmatpush1.msra.mxu0 0.0
        %1058 = vmatprep.subr.mxu0 0.0
        %1059 = vmatpush1.msra.mxu0 %v1023
        %1060 = vmatprep.subr.mxu0 0.0
        %1061 = vmatpush2.msra.mxu0 0.0
        %1062 = vmatprep.subr.mxu0 0.0
        %1063 = vmatpush2.msra.mxu0 0.0
        %1064 = vmatprep.subr.mxu0 0.0
        %1065 = vmatpush2.msra.mxu0 0.0
        %1066 = vmatprep.subr.mxu0 0.0
        %1067 = vmatpush2.msra.mxu0 0.0
        %1068 = vmatprep.subr.mxu0 0.0
        %1069 = vmatpush2.msra.mxu0 0.0
        %1070 = vmatprep.subr.mxu0 0.0
        %1071 = vmatpush2.msra.mxu0 0.0
        %1072 = vmatprep.subr.mxu0 0.0
        %1073 = vmatpush2.msra.mxu0 0.0
        %1074 = vmatprep.subr.mxu0 0.0
        %1075 = vmatpush2.msra.mxu0 0.0
        %1076 = vmatprep.subr.mxu0 0.0
        %1077 = vmatpush2.msra.mxu0 0.0
        %1078 = vmatprep.subr.mxu0 0.0
        %1079 = vmatpush2.msra.mxu0 0.0
        %1080 = vmatprep.subr.mxu0 0.0
        %1081 = vmatpush2.msra.mxu0 0.0
        %1082 = vmatprep.subr.mxu0 0.0
        %1083 = vmatpush2.msra.mxu0 0.0
        %1084 = vmatprep.subr.mxu0 0.0
        %1085 = vmatpush2.msra.mxu0 0.0
        %1086 = vmatprep.subr.mxu0 0.0
        %1087 = vmatpush2.msra.mxu0 0.0
        %1088 = vmatprep.subr.mxu0 0.0
        %1089 = vmatpush2.msra.mxu0 0.0
        %1090 = vmatprep.subr.mxu0 0.0
        %1091 = vmatpush2.msra.mxu0 0.0
        %1092 = vmatprep.mubr.f32.mxu0 0.0
        %1093 = vmatmul.mubr.f32.gmra.mxu0 %v1026
        %v1094 = vpop.f32.mrf.mxu0
        %v1095 = vadd.f32 0.0, %v1094
        %v1096 = vpop.f32.mrf.mxu0
        %1097 = vdwg.mxu0
        %1098 = vrot.lane.b32.xlu0 %v462, 104
        %v1099 = vpop.permute.xlu0 %1098
        %1100 = vrot.lane.b32.xlu0 %v525, 104
        %v1101 = vpop.permute.xlu0 %1100
        %v1102 = vsel %vm594, %v1099, 0
        %v1104 = vsel %vm594, %v1101, 0
        %1106 = vmatprep.subr.mxu0 0.0
        %1107 = vmatpush1.xpose.msra.mxu0 0.0
        %1108 = vmatprep.subr.mxu0 0.0
        %1109 = vmatpush1.xpose.msra.mxu0 0.0
        %1110 = vmatprep.subr.mxu0 0.0
        %1111 = vmatpush1.xpose.msra.mxu0 0.0
        %1112 = vmatprep.subr.mxu0 0.0
        %1113 = vmatpush1.xpose.msra.mxu0 0.0
        %1114 = vmatprep.subr.mxu0 0.0
        %1115 = vmatpush1.xpose.msra.mxu0 0.0
        %1116 = vmatprep.subr.mxu0 0.0
        %1117 = vmatpush1.xpose.msra.mxu0 0.0
        %1118 = vmatprep.subr.mxu0 0.0
        %1119 = vmatpush1.xpose.msra.mxu0 0.0
        %1120 = vmatprep.subr.mxu0 0.0
        %1121 = vmatpush1.xpose.msra.mxu0 0.0
        %1122 = vmatprep.subr.mxu0 0.0
        %1123 = vmatpush1.xpose.msra.mxu0 0.0
        %1124 = vmatprep.subr.mxu0 0.0
        %1125 = vmatpush1.xpose.msra.mxu0 0.0
        %1126 = vmatprep.subr.mxu0 0.0
        %1127 = vmatpush1.xpose.msra.mxu0 0.0
        %1128 = vmatprep.subr.mxu0 0.0
        %1129 = vmatpush1.xpose.msra.mxu0 0.0
        %1130 = vmatprep.subr.mxu0 0.0
        %1131 = vmatpush1.xpose.msra.mxu0 0.0
        %1132 = vmatprep.subr.mxu0 0.0
        %1133 = vmatpush1.xpose.msra.mxu0 0.0
        %1134 = vmatprep.subr.mxu0 0.0
        %1135 = vmatpush1.xpose.msra.mxu0 0.0
        %1136 = vmatprep.subr.mxu0 0.0
        %1137 = vmatpush1.xpose.msra.mxu0 %v1104
        %1138 = vmatprep.subr.mxu0 0.0
        %1139 = vmatpush2.xpose.msra.mxu0 0.0
        %1140 = vmatprep.subr.mxu0 0.0
        %1141 = vmatpush2.xpose.msra.mxu0 0.0
        %1142 = vmatprep.subr.mxu0 0.0
        %1143 = vmatpush2.xpose.msra.mxu0 0.0
        %1144 = vmatprep.subr.mxu0 0.0
        %1145 = vmatpush2.xpose.msra.mxu0 0.0
        %1146 = vmatprep.subr.mxu0 0.0
        %1147 = vmatpush2.xpose.msra.mxu0 0.0
        %1148 = vmatprep.subr.mxu0 0.0
        %1149 = vmatpush2.xpose.msra.mxu0 0.0
        %1150 = vmatprep.subr.mxu0 0.0
        %1151 = vmatpush2.xpose.msra.mxu0 0.0
        %1152 = vmatprep.subr.mxu0 0.0
        %1153 = vmatpush2.xpose.msra.mxu0 0.0
        %1154 = vmatprep.subr.mxu0 0.0
        %1155 = vmatpush2.xpose.msra.mxu0 0.0
        %1156 = vmatprep.subr.mxu0 0.0
        %1157 = vmatpush2.xpose.msra.mxu0 0.0
        %1158 = vmatprep.subr.mxu0 0.0
        %1159 = vmatpush2.xpose.msra.mxu0 0.0
        %1160 = vmatprep.subr.mxu0 0.0
        %1161 = vmatpush2.xpose.msra.mxu0 0.0
        %1162 = vmatprep.subr.mxu0 0.0
        %1163 = vmatpush2.xpose.msra.mxu0 0.0
        %1164 = vmatprep.subr.mxu0 0.0
        %1165 = vmatpush2.xpose.msra.mxu0 0.0
        %1166 = vmatprep.subr.mxu0 0.0
        %1167 = vmatpush2.xpose.msra.mxu0 0.0
        %1168 = vmatprep.subr.mxu0 0.0
        %1169 = vmatpush2.xpose.msra.mxu0 0.0
        %1170 = vmatprep.mubr.f32.mxu0 0.0
        %1171 = vmatmul.mubr.f32.gmra.mxu0 %v1102
        %v1172 = vpop.f32.mrf.mxu0
        %v1173 = vadd.f32 0.0, %v1172
        %v1174 = vpop.f32.mrf.mxu0
        %1175 = vdwg.mxu0
        %v1176 = vmul.f32 %v1173, 0.35355338
        %v1177 = vadd.f32 %v1176, %v676
        %v1178 = vsel %vm594, %v1177, -inf
        %1179 = vmax.xlane.f32.xlu0 %v1178
        %v1180 = vpop.xlane.xlu0 %1179
        %v1181 = vsub.f32 %v1177, %v1180
        %v1182 = vmul.f32 %v1181, 1.442695
        %v1183 = vpow.pop %v1182
        %v1184 = vsel %vm594, %v1183, 0.0
        %1185 = vadd.xlane.f32.xlu0 %v1184
        %v1186 = vpop.xlane.xlu0 %1185
        %v1187 = vrcp.pop %v1186
        %v1188 = vmul.f32 %v1183, %v1187
        %1189 = vrot.lane.b32.xlu0 %v588, 104
        %v1190 = vpop.permute.xlu0 %1189
        %v1193 = vsel %vm594, %v1188, 0
        %1195 = vmatprep.subr.mxu0 0.0
        %1196 = vmatpush1.msra.mxu0 0.0
        %1197 = vmatprep.subr.mxu0 0.0
        %1198 = vmatpush1.msra.mxu0 0.0
        %1199 = vmatprep.subr.mxu0 0.0
        %1200 = vmatpush1.msra.mxu0 0.0
        %1201 = vmatprep.subr.mxu0 0.0
        %1202 = vmatpush1.msra.mxu0 0.0
        %1203 = vmatprep.subr.mxu0 0.0
        %1204 = vmatpush1.msra.mxu0 0.0
        %1205 = vmatprep.subr.mxu0 0.0
        %1206 = vmatpush1.msra.mxu0 0.0
        %1207 = vmatprep.subr.mxu0 0.0
        %1208 = vmatpush1.msra.mxu0 0.0
        %1209 = vmatprep.subr.mxu0 0.0
        %1210 = vmatpush1.msra.mxu0 0.0
        %1211 = vmatprep.subr.mxu0 0.0
        %1212 = vmatpush1.msra.mxu0 0.0
        %1213 = vmatprep.subr.mxu0 0.0
        %1214 = vmatpush1.msra.mxu0 0.0
        %1215 = vmatprep.subr.mxu0 0.0
        %1216 = vmatpush1.msra.mxu0 0.0
        %1217 = vmatprep.subr.mxu0 0.0
        %1218 = vmatpush1.msra.mxu0 0.0
        %1219 = vmatprep.subr.mxu0 0.0
        %1220 = vmatpush1.msra.mxu0 0.0
        %1221 = vmatprep.subr.mxu0 0.0
        %1222 = vmatpush1.msra.mxu0 0.0
        %1223 = vmatprep.subr.mxu0 0.0
        %1224 = vmatpush1.msra.mxu0 0.0
        %1225 = vmatprep.subr.mxu0 0.0
        %1226 = vmatpush1.msra.mxu0 %v1190
        %1227 = vmatprep.subr.mxu0 0.0
        %1228 = vmatpush2.msra.mxu0 0.0
        %1229 = vmatprep.subr.mxu0 0.0
        %1230 = vmatpush2.msra.mxu0 0.0
        %1231 = vmatprep.subr.mxu0 0.0
        %1232 = vmatpush2.msra.mxu0 0.0
        %1233 = vmatprep.subr.mxu0 0.0
        %1234 = vmatpush2.msra.mxu0 0.0
        %1235 = vmatprep.subr.mxu0 0.0
        %1236 = vmatpush2.msra.mxu0 0.0
        %1237 = vmatprep.subr.mxu0 0.0
        %1238 = vmatpush2.msra.mxu0 0.0
        %1239 = vmatprep.subr.mxu0 0.0
        %1240 = vmatpush2.msra.mxu0 0.0
        %1241 = vmatprep.subr.mxu0 0.0
        %1242 = vmatpush2.msra.mxu0 0.0
        %1243 = vmatprep.subr.mxu0 0.0
        %1244 = vmatpush2.msra.mxu0 0.0
        %1245 = vmatprep.subr.mxu0 0.0
        %1246 = vmatpush2.msra.mxu0 0.0
        %1247 = vmatprep.subr.mxu0 0.0
        %1248 = vmatpush2.msra.mxu0 0.0
        %1249 = vmatprep.subr.mxu0 0.0
        %1250 = vmatpush2.msra.mxu0 0.0
        %1251 = vmatprep.subr.mxu0 0.0
        %1252 = vmatpush2.msra.mxu0 0.0
        %1253 = vmatprep.subr.mxu0 0.0
        %1254 = vmatpush2.msra.mxu0 0.0
        %1255 = vmatprep.subr.mxu0 0.0
        %1256 = vmatpush2.msra.mxu0 0.0
        %1257 = vmatprep.subr.mxu0 0.0
        %1258 = vmatpush2.msra.mxu0 0.0
        %1259 = vmatprep.mubr.f32.mxu0 0.0
        %1260 = vmatmul.mubr.f32.gmra.mxu0 %v1193
        %v1261 = vpop.f32.mrf.mxu0
        %v1262 = vadd.f32 0.0, %v1261
        %v1263 = vpop.f32.mrf.mxu0
        %1264 = vdwg.mxu0
        %1266 = vrot.lane.b32.xlu0 %v928, 8
        %v1267 = vpop.permute.xlu0 %1266
        %1270 = vrot.lane.b32.xlu0 %v1095, 16
        %v1271 = vpop.permute.xlu0 %1270
        %1274 = vrot.lane.b32.xlu0 %v1262, 24
        %v1275 = vpop.permute.xlu0 %1274
        %v1277 = vsel %vm594, %v760, %v1267
        %vm1278 = vcmask 130048
        %v1279 = vsel %vm1278, %v1277, %v1271
        %vm1280 = vcmask 195584
        %v1281 = vsel %vm1280, %v1279, %v1275
        %1282 = vst.msk [vmem:[%s397] sm:$0xff] %vm423, %v1281
        %s1283 = sand.u32 %s215, 1
        %s1284 = scalar_lea.sflag [#allocation4], %s1283
        %s1285 = sand.u32 %s215, 1
        %s1286 = smul.addr %s1285, 8
        %s1287 = scalar_lea.vmem [#allocation11], %s1286
        // Predicated region
        $region73: #{tpu_custom_call.1} parent=51 // pred_check
          %p1288 = pneg %p225
        $region74: #{tpu_custom_call.1} parent=51 // pred_check_branch
          %1290 = sbr.rel (%p1288) target = $region76
        $region75: #{tpu_custom_call.1} parent=51 // pred_region
          %s1292 = ssub.s32 128, 128
          %1293 = vsyncadd %s1284, %s1292
          %s1294 = smul.addr %s29, 128
          %s1295 = scalar_lea.hbm %s8, %s1294
          %s1297 = sshll.u32 %s1287, 4
          %s1298 = int_to_ptr.vmem [resolvable:$true] %s1297
          %1300 = dma.vmem_to_hbm [thread:$0]  %s1298, 128, %s1295, %s1284
        $region76: #{tpu_custom_call.1} parent=51 // pred_fallthru
          _
      $region52: #{tpu_custom_call.1} parent=5 // pred_fallthru
        _
      %p1301 = scmp.le.s32.totalorder 2, %s24
      // Predicated region
      $region77: #{tpu_custom_call.1} parent=5 // pred_check
        %p1302 = pneg %p1301
      $region78: #{tpu_custom_call.1} parent=5 // pred_check_branch
        %1304 = sbr.rel (%p1302) target = $region80
      $region79: #{tpu_custom_call.1} parent=5 // pred_region
        %s1305 = ssub.s32 %s24, 2
        // Predicated region
        $region81: #{tpu_custom_call.1} parent=79 // pred_check
          %p1306 = pneg %p231
        $region82: #{tpu_custom_call.1} parent=79 // pred_check_branch
          %1308 = sbr.rel (%p1306) target = $region84
        $region83: #{tpu_custom_call.1} parent=79 // pred_region
          %s1309 = sand.u32 %s216, 1
          %s1310 = scalar_lea.sflag [#allocation4], %s1309
          %s1311 = sand.u32 %s216, 1
          %s1312 = smul.addr %s1311, 8
          %s1313 = scalar_lea.vmem [#allocation11], %s1312
          %1314 = dma.done %s1310, 128
        $region84: #{tpu_custom_call.1} parent=79 // pred_fallthru
          _
      $region80: #{tpu_custom_call.1} parent=5 // pred_fallthru
        _
    $region6: #{tpu_custom_call.1} parent=1 // loop_footer
      %s28 = sadd.s32 1, %s24
    $region7: #{tpu_custom_call.1} parent=1 // loop_footer_branch
      %23 = sbr.rel target = $region3
    $region8: #{tpu_custom_call.1} parent=1 // loop_exit
      _
    %1315 = vsyncpa [#allocation3], 1
    %s1316 = scalar_lea.sflag [#allocation3], 1
    %1317 = vsyncpa %s1316, 1
    %1318 = vsyncpa [#allocation6], 1
    %s1319 = scalar_lea.sflag [#allocation6], 1
    %1320 = vsyncpa %s1319, 1
    %1321 = vsyncpa [#allocation9], 1
    %1322 = vsyncpa [#allocation4], 1
    %s1323 = scalar_lea.sflag [#allocation4], 1
    %1324 = vsyncpa %s1323, 1

</llo_original>
